<compile_context>
chip_gen: v5e
topology: v5e:2x2
jax: 0.10.0
libtpu: 0.0.40
codegen_flags: <defaults>
</compile_context>

<pallas_src>
import jax
import jax.numpy as jnp
from jax.experimental import pallas as pl
from jax.experimental.pallas import tpu as pltpu

# ---- small synthetic config standing in for the real LLM layer ---------------
HIDDEN_SIZE         = 128
NUM_ATTENTION_HEADS = 4
NUM_KEY_VALUE_HEADS = 2
HEAD_DIM            = 32
INTERMEDIATE_SIZE   = 256
SEQ_LENGTH          = 8            # past KV-cache length
KV_GROUPS           = NUM_ATTENTION_HEADS // NUM_KEY_VALUE_HEADS
TOTAL_KV            = SEQ_LENGTH + 1
MAX_POSITION        = SEQ_LENGTH + 8   # RoPE table covers the natural decode position
RMS_EPS             = 1e-6
ROPE_THETA          = 10000.0

Q_W  = NUM_ATTENTION_HEADS * HEAD_DIM      # 128
KV_W = NUM_KEY_VALUE_HEADS * HEAD_DIM      # 64
# column offsets inside the fused QKV(+rotated) weight: [q | q@R | k | k@R | v]
Q_OFF, QR_OFF = 0, Q_W
K_OFF, KR_OFF, V_OFF = 2 * Q_W, 2 * Q_W + KV_W, 2 * Q_W + 2 * KV_W
QKV_W = 2 * Q_W + 3 * KV_W                 # 448


def _rmsnorm(x, w):
    var = jnp.mean(x * x, axis=-1, keepdims=True)
    return x * jax.lax.rsqrt(var + RMS_EPS) * w


def _rotate_half(x):  # used only by the pure-JAX reference
    h = HEAD_DIM // 2
    return jnp.concatenate([-x[:, h:], x[:, :h]], axis=-1)


# ------------------------------- Pallas kernel --------------------------------
def block_cache_kernel(
    x_ref, cos_q_ref, sin_q_ref, cos_k_ref, sin_k_ref, mask_ref,
    past_k_ref, past_v_ref,
    ln1_ref, wqkv_ref, bqkv_ref, wo_ref, ln2_ref, wgu_ref, wd_ref,
    hidden_out_ref, pk_out_ref, pv_out_ref):
    x    = x_ref[...]          # (1, HIDDEN_SIZE) f32
    mask = mask_ref[...]       # (1, TOTAL_KV)    f32

    # ---- input RMSNorm + ONE fused bf16 matmul for q, rotate_half(q), k, rotate_half(k), v
    h_ln = _rmsnorm(x, ln1_ref[...])
    h_b  = h_ln.astype(jnp.bfloat16)
    qkv  = jnp.dot(h_b, wqkv_ref[...], preferred_element_type=jnp.float32) + bqkv_ref[...]
    q  = qkv[:, Q_OFF:Q_OFF + Q_W]
    qr = qkv[:, QR_OFF:QR_OFF + Q_W]      # == rotate_half(q): R folded into the weights
    k  = qkv[:, K_OFF:K_OFF + KV_W]
    kr = qkv[:, KR_OFF:KR_OFF + KV_W]     # == rotate_half(k)
    v  = qkv[:, V_OFF:V_OFF + KV_W]

    # RoPE: pure element-wise VPU math (cos/sin already tiled per head in the wrapper).
    q_rot = q * cos_q_ref[...] + qr * sin_q_ref[...]        # (1, NH*HD)
    k_rot = k * cos_k_ref[...] + kr * sin_k_ref[...]        # (1, KV*HD)

    # ---- present KV cache: direct slice stores (no concatenate temporaries) ----
    pk_out_ref[pl.ds(0, SEQ_LENGTH), :] = past_k_ref[...]
    pv_out_ref[pl.ds(0, SEQ_LENGTH), :] = past_v_ref[...]
    pk_out_ref[pl.ds(SEQ_LENGTH, 1), :] = k_rot
    pv_out_ref[pl.ds(SEQ_LENGTH, 1), :] = v

    # read the just-written present cache straight back from the output VMEM buffers
    k_all = pk_out_ref[...]                                  # (TOTAL_KV, KV*HD)
    v_all = pv_out_ref[...]

    # ---- GQA attention, batched per KV group (2 score dots + 2 PV dots, 1 softmax) ----
    scale = 1.0 / (HEAD_DIM ** 0.5)
    grp_scores = []
    for g in range(NUM_KEY_VALUE_HEADS):
        q_grp = jnp.concatenate(
            [q_rot[:, (g * KV_GROUPS + j) * HEAD_DIM:(g * KV_GROUPS + j + 1) * HEAD_DIM]
             for j in range(KV_GROUPS)], axis=0)             # (KV_GROUPS, HD)
        k_g = k_all[:, g * HEAD_DIM:(g + 1) * HEAD_DIM]      # (TOTAL_KV, HD)
        grp_scores.append(jax.lax.dot_general(
            q_grp, k_g, (((1,), (1,)), ((), ())),
            preferred_element_type=jnp.float32) * scale)     # (KV_GROUPS, TOTAL_KV)
    scores = jnp.concatenate(grp_scores, axis=0) + mask      # (NH, TOTAL_KV)

    m = jnp.max(scores, axis=-1, keepdims=True)
    e = jnp.exp(scores - m)
    s = jnp.sum(e, axis=-1, keepdims=True)
    p = e * pl.reciprocal(s, approx=True)                    # divide -> EUP, done once

    head_rows = []
    for g in range(NUM_KEY_VALUE_HEADS):
        v_g = v_all[:, g * HEAD_DIM:(g + 1) * HEAD_DIM]      # (TOTAL_KV, HD)
        p_g = p[g * KV_GROUPS:(g + 1) * KV_GROUPS, :]        # (KV_GROUPS, TOTAL_KV)
        o_g = jnp.dot(p_g, v_g, preferred_element_type=jnp.float32)  # (KV_GROUPS, HD)
        for j in range(KV_GROUPS):
            head_rows.append(o_g[j:j + 1, :])
    attn = jnp.concatenate(head_rows, axis=-1)               # (1, NH*HD), head-major lanes

    attn = jnp.dot(attn.astype(jnp.bfloat16), wo_ref[...],
                   preferred_element_type=jnp.float32)
    h1 = x + attn

    # ---- post-attention RMSNorm + fused gate/up SwiGLU MLP ----
    h_ln2 = _rmsnorm(h1, ln2_ref[...])
    gu = jnp.dot(h_ln2.astype(jnp.bfloat16), wgu_ref[...],
                 preferred_element_type=jnp.float32)         # (1, 2*I)
    gate = gu[:, :INTERMEDIATE_SIZE]
    up   = gu[:, INTERMEDIATE_SIZE:]
    act  = gate * jax.nn.sigmoid(gate) * up
    down = jnp.dot(act.astype(jnp.bfloat16), wd_ref[...],
                   preferred_element_type=jnp.float32)
    hidden_out_ref[...] = h1 + down


# ------------------------------- wrapper ---------------------------------------
def _full_spec(shape):
    return pl.BlockSpec(shape, lambda i, _nd=len(shape): (0,) * _nd)


@jax.jit
def block_cache_forward(params, hidden_states, position_ids, attention_mask, past_k, past_v):
    x = hidden_states.reshape(1, HIDDEN_SIZE).astype(jnp.float32)
    # gather cos/sin at position_ids (glue, not hot path); tile per head for flat-lane RoPE
    cos_p = jnp.take(params["cos_table"], position_ids[0], axis=0)   # (1, HEAD_DIM)
    sin_p = jnp.take(params["sin_table"], position_ids[0], axis=0)
    cos_q = jnp.tile(cos_p, (1, NUM_ATTENTION_HEADS))
    sin_q = jnp.tile(sin_p, (1, NUM_ATTENTION_HEADS))
    cos_k = jnp.tile(cos_p, (1, NUM_KEY_VALUE_HEADS))
    sin_k = jnp.tile(sin_p, (1, NUM_KEY_VALUE_HEADS))
    mask = attention_mask.reshape(1, TOTAL_KV).astype(jnp.float32)
    pk = past_k.reshape(SEQ_LENGTH, KV_W).astype(jnp.float32)
    pv = past_v.reshape(SEQ_LENGTH, KV_W).astype(jnp.float32)

    inputs = (x, cos_q, sin_q, cos_k, sin_k, mask, pk, pv,
              params["ln1"], params["wqkv_bf16"], params["bqkv"], params["wo_bf16"],
              params["ln2"], params["wgu_bf16"], params["wd_bf16"])

    out_shapes = (
        jax.ShapeDtypeStruct((1, HIDDEN_SIZE), jnp.float32),
        jax.ShapeDtypeStruct((TOTAL_KV, KV_W), jnp.float32),
        jax.ShapeDtypeStruct((TOTAL_KV, KV_W), jnp.float32),
    )
    hidden, pk_out, pv_out = pl.pallas_call(
        block_cache_kernel,
        grid=(1,),
        in_specs=[_full_spec(a.shape) for a in inputs],
        out_specs=tuple(_full_spec(s.shape) for s in out_shapes),
        out_shape=out_shapes,
        compiler_params=pltpu.CompilerParams(dimension_semantics=("arbitrary",)),
    )(*inputs)

    hidden = hidden.reshape(1, 1, HIDDEN_SIZE)
    present_k = pk_out.reshape(1, TOTAL_KV, NUM_KEY_VALUE_HEADS, HEAD_DIM)
    present_v = pv_out.reshape(1, TOTAL_KV, NUM_KEY_VALUE_HEADS, HEAD_DIM)
    return hidden, present_k, present_v


# ------------------------- deterministic parameter init -------------------------
def _rope_tables():
    inv_freq = 1.0 / (ROPE_THETA ** (jnp.arange(0, HEAD_DIM, 2, dtype=jnp.float32) / HEAD_DIM))
    pos = jnp.arange(MAX_POSITION, dtype=jnp.float32)
    freqs = jnp.outer(pos, inv_freq)                       # (MAX_POSITION, HD/2)
    emb = jnp.concatenate([freqs, freqs], axis=-1)         # (MAX_POSITION, HD)
    return jnp.cos(emb), jnp.sin(emb)


def _rotate_half_matrix(n_heads):
    # per-head R with x @ R == rotate_half(x);  block-diagonal over heads
    h = HEAD_DIM // 2
    r = jnp.block([[jnp.zeros((h, h), jnp.float32), jnp.eye(h, dtype=jnp.float32)],
                   [-jnp.eye(h, dtype=jnp.float32), jnp.zeros((h, h), jnp.float32)]])
    return jnp.kron(jnp.eye(n_heads, dtype=jnp.float32), r)


def init_params(key):
    ks = jax.random.split(key, 10)
    s = 0.05
    w = lambda k, shape: jax.random.normal(k, shape, jnp.float32) * s
    cos_t, sin_t = _rope_tables()

    wq = w(ks[0], (HIDDEN_SIZE, Q_W));  bq = w(ks[1], (1, Q_W))
    wk = w(ks[2], (HIDDEN_SIZE, KV_W)); bk = w(ks[3], (1, KV_W))
    wv = w(ks[4], (HIDDEN_SIZE, KV_W)); bv = w(ks[5], (1, KV_W))
    wo = w(ks[6], (Q_W, HIDDEN_SIZE))
    wg = w(ks[7], (HIDDEN_SIZE, INTERMEDIATE_SIZE))
    wu = w(ks[8], (HIDDEN_SIZE, INTERMEDIATE_SIZE))
    wd = w(ks[9], (INTERMEDIATE_SIZE, HIDDEN_SIZE))

    rq = _rotate_half_matrix(NUM_ATTENTION_HEADS)
    rk = _rotate_half_matrix(NUM_KEY_VALUE_HEADS)
    wqr, bqr = wq @ rq, bq @ rq          # exact ±column permutation of wq / bq
    wkr, bkr = wk @ rk, bk @ rk

    bf16 = jnp.bfloat16
    return {
        "ln1": jnp.ones((1, HIDDEN_SIZE), jnp.float32),
        "ln2": jnp.ones((1, HIDDEN_SIZE), jnp.float32),
        # fused, bf16 weights consumed by the Pallas kernel
        "wqkv_bf16": jnp.concatenate([wq, wqr, wk, wkr, wv], axis=1).astype(bf16),
        "bqkv":      jnp.concatenate([bq, bqr, bk, bkr, bv], axis=1),
        "wo_bf16":   wo.astype(bf16),
        "wgu_bf16":  jnp.concatenate([wg, wu], axis=1).astype(bf16),
        "wd_bf16":   wd.astype(bf16),
        # unfused bf16 copies for the pure-JAX reference
        "wq_bf16": wq.astype(bf16), "bq": bq,
        "wk_bf16": wk.astype(bf16), "bk": bk,
        "wv_bf16": wv.astype(bf16), "bv": bv,
        "wg_bf16": wg.astype(bf16), "wu_bf16": wu.astype(bf16),
        "cos_table": cos_t, "sin_table": sin_t,
    }


# ------------------------------ pure-JAX reference ------------------------------
def _ref_forward(p, hidden_states, position_ids, attention_mask, past_k, past_v):
    f32 = jnp.float32
    x = hidden_states.reshape(1, HIDDEN_SIZE).astype(f32)
    cos = jnp.take(p["cos_table"], position_ids[0], axis=0)
    sin = jnp.take(p["sin_table"], position_ids[0], axis=0)
    mask = attention_mask.reshape(1, TOTAL_KV).astype(f32)
    pk = past_k.reshape(SEQ_LENGTH, KV_W).astype(f32)
    pv = past_v.reshape(SEQ_LENGTH, KV_W).astype(f32)

    def bdot(a, wmat):
        return jnp.dot(a.astype(jnp.bfloat16), wmat, preferred_element_type=f32)

    h_ln = _rmsnorm(x, p["ln1"])
    q = bdot(h_ln, p["wq_bf16"]) + p["bq"]
    k = bdot(h_ln, p["wk_bf16"]) + p["bk"]
    v = bdot(h_ln, p["wv_bf16"]) + p["bv"]
    k_rot = jnp.concatenate(
        [k[:, g * HEAD_DIM:(g + 1) * HEAD_DIM] * cos
         + _rotate_half(k[:, g * HEAD_DIM:(g + 1) * HEAD_DIM]) * sin
         for g in range(NUM_KEY_VALUE_HEADS)], axis=-1)
    k_all = jnp.concatenate([pk, k_rot], axis=0)
    v_all = jnp.concatenate([pv, v], axis=0)

    scale = 1.0 / (HEAD_DIM ** 0.5)
    outs = []
    for h in range(NUM_ATTENTION_HEADS):
        g = h // KV_GROUPS
        q_h = q[:, h * HEAD_DIM:(h + 1) * HEAD_DIM]
        q_h = q_h * cos + _rotate_half(q_h) * sin
        k_g = k_all[:, g * HEAD_DIM:(g + 1) * HEAD_DIM]
        v_g = v_all[:, g * HEAD_DIM:(g + 1) * HEAD_DIM]
        sc = (q_h @ k_g.T) * scale + mask
        outs.append(jax.nn.softmax(sc, axis=-1) @ v_g)
    attn = bdot(jnp.concatenate(outs, axis=-1), p["wo_bf16"])
    h1 = x + attn

    h_ln2 = _rmsnorm(h1, p["ln2"])
    gate = bdot(h_ln2, p["wg_bf16"])
    up   = bdot(h_ln2, p["wu_bf16"])
    down = bdot(jax.nn.silu(gate) * up, p["wd_bf16"])
    hid = (h1 + down).reshape(1, 1, HIDDEN_SIZE)
    return (hid,
            k_all.reshape(1, TOTAL_KV, NUM_KEY_VALUE_HEADS, HEAD_DIM),
            v_all.reshape(1, TOTAL_KV, NUM_KEY_VALUE_HEADS, HEAD_DIM))


# ------------------------------------ main --------------------------------------
if __name__ == "__main__":
    key = jax.random.PRNGKey(0)
    k_param, k_x, k_pk, k_pv = jax.random.split(key, 4)
    params = init_params(k_param)

    hidden_states = jax.random.normal(k_x, (1, 1, HIDDEN_SIZE), jnp.float32)
    # natural decode position after a full past — now covered by the extended RoPE table
    cur_pos = SEQ_LENGTH
    position_ids = jnp.array([[cur_pos]], dtype=jnp.int32)
    # pretend the first two cache slots are padding; everything else (incl. the new token) visible
    mask1d = jnp.where(jnp.arange(TOTAL_KV) < 2, -1e4, 0.0).astype(jnp.float32)
    attention_mask = mask1d.reshape(1, 1, 1, TOTAL_KV)
    past_k = jax.random.normal(k_pk, (1, SEQ_LENGTH, NUM_KEY_VALUE_HEADS, HEAD_DIM), jnp.float32)
    past_v = jax.random.normal(k_pv, (1, SEQ_LENGTH, NUM_KEY_VALUE_HEADS, HEAD_DIM), jnp.float32)

    out = block_cache_forward(params, hidden_states, position_ids, attention_mask,
                              past_k, past_v)
    out = jax.block_until_ready(out)

    ref = _ref_forward(params, hidden_states, position_ids, attention_mask, past_k, past_v)
    for a, b in zip(out, ref):
        assert a.shape == b.shape, (a.shape, b.shape)
        assert jnp.allclose(a, b, rtol=2e-2, atol=2e-2), float(jnp.max(jnp.abs(a - b)))

    print("KERNEL_OK")
</pallas_src>

<mosaic_0001>
module attributes {stable_mosaic.version = 11 : i64} {
  func.func @block_cache_kernel(%arg0: i32, %arg1: memref<1x128xf32, #tpu.memory_space<vmem>>, %arg2: memref<1x128xf32, #tpu.memory_space<vmem>>, %arg3: memref<1x128xf32, #tpu.memory_space<vmem>>, %arg4: memref<1x64xf32, #tpu.memory_space<vmem>>, %arg5: memref<1x64xf32, #tpu.memory_space<vmem>>, %arg6: memref<1x9xf32, #tpu.memory_space<vmem>>, %arg7: memref<8x64xf32, #tpu.memory_space<vmem>>, %arg8: memref<8x64xf32, #tpu.memory_space<vmem>>, %arg9: memref<1x128xf32, #tpu.memory_space<vmem>>, %arg10: memref<128x448xbf16, #tpu.memory_space<vmem>>, %arg11: memref<1x448xf32, #tpu.memory_space<vmem>>, %arg12: memref<128x128xbf16, #tpu.memory_space<vmem>>, %arg13: memref<1x128xf32, #tpu.memory_space<vmem>>, %arg14: memref<128x512xbf16, #tpu.memory_space<vmem>>, %arg15: memref<256x128xbf16, #tpu.memory_space<vmem>>, %arg16: memref<1x128xf32, #tpu.memory_space<vmem>>, %arg17: memref<9x64xf32, #tpu.memory_space<vmem>>, %arg18: memref<9x64xf32, #tpu.memory_space<vmem>>) attributes {dimension_semantics = [#tpu.dimension_semantics<arbitrary>], iteration_bounds = array<i64: 1>, scalar_prefetch = 0 : i64, scratch_operands = 0 : i64, tpu.core_type = #tpu.core_type<tc>, window_params = [{pipeline_mode = #tpu.pipeline_mode<synchronous>, transform_indices = @transform_0, window_bounds = array<i64: 1, 128>}, {pipeline_mode = #tpu.pipeline_mode<synchronous>, transform_indices = @transform_1, window_bounds = array<i64: 1, 128>}, {pipeline_mode = #tpu.pipeline_mode<synchronous>, transform_indices = @transform_2, window_bounds = array<i64: 1, 128>}, {pipeline_mode = #tpu.pipeline_mode<synchronous>, transform_indices = @transform_3, window_bounds = array<i64: 1, 64>}, {pipeline_mode = #tpu.pipeline_mode<synchronous>, transform_indices = @transform_4, window_bounds = array<i64: 1, 64>}, {pipeline_mode = #tpu.pipeline_mode<synchronous>, transform_indices = @transform_5, window_bounds = array<i64: 1, 9>}, {pipeline_mode = #tpu.pipeline_mode<synchronous>, transform_indices = @transform_6, window_bounds = array<i64: 8, 64>}, {pipeline_mode = #tpu.pipeline_mode<synchronous>, transform_indices = @transform_7, window_bounds = array<i64: 8, 64>}, {pipeline_mode = #tpu.pipeline_mode<synchronous>, transform_indices = @transform_8, window_bounds = array<i64: 1, 128>}, {pipeline_mode = #tpu.pipeline_mode<synchronous>, transform_indices = @transform_9, window_bounds = array<i64: 128, 448>}, {pipeline_mode = #tpu.pipeline_mode<synchronous>, transform_indices = @transform_10, window_bounds = array<i64: 1, 448>}, {pipeline_mode = #tpu.pipeline_mode<synchronous>, transform_indices = @transform_11, window_bounds = array<i64: 128, 128>}, {pipeline_mode = #tpu.pipeline_mode<synchronous>, transform_indices = @transform_12, window_bounds = array<i64: 1, 128>}, {pipeline_mode = #tpu.pipeline_mode<synchronous>, transform_indices = @transform_13, window_bounds = array<i64: 128, 512>}, {pipeline_mode = #tpu.pipeline_mode<synchronous>, transform_indices = @transform_14, window_bounds = array<i64: 256, 128>}, {pipeline_mode = #tpu.pipeline_mode<synchronous>, transform_indices = @transform_15, window_bounds = array<i64: 1, 128>}, {pipeline_mode = #tpu.pipeline_mode<synchronous>, transform_indices = @transform_16, window_bounds = array<i64: 9, 64>}, {pipeline_mode = #tpu.pipeline_mode<synchronous>, transform_indices = @transform_17, window_bounds = array<i64: 9, 64>}]} {
    %c0 = arith.constant 0 : index
    %c0_0 = arith.constant 0 : index
    %0 = vector.load %arg1[%c0, %c0_0] : memref<1x128xf32, #tpu.memory_space<vmem>>, vector<1x128xf32>
    %c0_1 = arith.constant 0 : index
    %c0_2 = arith.constant 0 : index
    %1 = vector.load %arg6[%c0_1, %c0_2] : memref<1x9xf32, #tpu.memory_space<vmem>>, vector<1x9xf32>
    %c0_3 = arith.constant 0 : index
    %c0_4 = arith.constant 0 : index
    %2 = vector.load %arg9[%c0_3, %c0_4] : memref<1x128xf32, #tpu.memory_space<vmem>>, vector<1x128xf32>
    %3 = arith.mulf %0, %0 : vector<1x128xf32>
    %cst = arith.constant dense<0.000000e+00> : vector<1xf32>
    %4 = vector.multi_reduction <add>, %3, %cst [1] : vector<1x128xf32> to vector<1xf32>
    %5 = vector.shape_cast %4 : vector<1xf32> to vector<1x1xf32>
    %cst_5 = arith.constant 1.280000e+02 : f32
    %6 = vector.broadcast %cst_5 : f32 to vector<1x1xf32>
    %7 = arith.divf %5, %6 : vector<1x1xf32>
    %cst_6 = arith.constant 9.99999997E-7 : f32
    %8 = vector.broadcast %cst_6 : f32 to vector<1x1xf32>
    %9 = arith.addf %7, %8 : vector<1x1xf32>
    %10 = math.rsqrt %9 : vector<1x1xf32>
    %11 = vector.broadcast %10 : vector<1x1xf32> to vector<1x128xf32>
    %12 = arith.mulf %0, %11 : vector<1x128xf32>
    %13 = arith.mulf %12, %2 : vector<1x128xf32>
    %14 = arith.truncf %13 : vector<1x128xf32> to vector<1x128xbf16>
    %c0_7 = arith.constant 0 : index
    %c0_8 = arith.constant 0 : index
    %15 = vector.load %arg10[%c0_7, %c0_8] : memref<128x448xbf16, #tpu.memory_space<vmem>>, vector<128x448xbf16>
    %cst_9 = arith.constant dense<0.000000e+00> : vector<1x448xf32>
    %16 = tpu.matmul %14, %15, %cst_9 {dimension_numbers = #tpu.dot_dimension_numbers<[1], [0], [0], [1], [0, 0, 1, 1], [], []>} : vector<1x128xbf16>, vector<128x448xbf16>, vector<1x448xf32> -> vector<1x448xf32>
    %c0_10 = arith.constant 0 : index
    %c0_11 = arith.constant 0 : index
    %17 = vector.load %arg11[%c0_10, %c0_11] : memref<1x448xf32, #tpu.memory_space<vmem>>, vector<1x448xf32>
    %18 = arith.addf %16, %17 : vector<1x448xf32>
    %19 = vector.extract_strided_slice %18 {offsets = [0, 0], sizes = [1, 128], strides = [1, 1]} : vector<1x448xf32> to vector<1x128xf32>
    %20 = vector.extract_strided_slice %18 {offsets = [0, 128], sizes = [1, 128], strides = [1, 1]} : vector<1x448xf32> to vector<1x128xf32>
    %21 = vector.extract_strided_slice %18 {offsets = [0, 256], sizes = [1, 64], strides = [1, 1]} : vector<1x448xf32> to vector<1x64xf32>
    %22 = vector.extract_strided_slice %18 {offsets = [0, 320], sizes = [1, 64], strides = [1, 1]} : vector<1x448xf32> to vector<1x64xf32>
    %23 = vector.extract_strided_slice %18 {offsets = [0, 384], sizes = [1, 64], strides = [1, 1]} : vector<1x448xf32> to vector<1x64xf32>
    %c0_12 = arith.constant 0 : index
    %c0_13 = arith.constant 0 : index
    %24 = vector.load %arg2[%c0_12, %c0_13] : memref<1x128xf32, #tpu.memory_space<vmem>>, vector<1x128xf32>
    %25 = arith.mulf %19, %24 : vector<1x128xf32>
    %c0_14 = arith.constant 0 : index
    %c0_15 = arith.constant 0 : index
    %26 = vector.load %arg3[%c0_14, %c0_15] : memref<1x128xf32, #tpu.memory_space<vmem>>, vector<1x128xf32>
    %27 = arith.mulf %20, %26 : vector<1x128xf32>
    %28 = arith.addf %25, %27 : vector<1x128xf32>
    %c0_16 = arith.constant 0 : index
    %c0_17 = arith.constant 0 : index
    %29 = vector.load %arg4[%c0_16, %c0_17] : memref<1x64xf32, #tpu.memory_space<vmem>>, vector<1x64xf32>
    %30 = arith.mulf %21, %29 : vector<1x64xf32>
    %c0_18 = arith.constant 0 : index
    %c0_19 = arith.constant 0 : index
    %31 = vector.load %arg5[%c0_18, %c0_19] : memref<1x64xf32, #tpu.memory_space<vmem>>, vector<1x64xf32>
    %32 = arith.mulf %22, %31 : vector<1x64xf32>
    %33 = arith.addf %30, %32 : vector<1x64xf32>
    %c0_20 = arith.constant 0 : index
    %c0_21 = arith.constant 0 : index
    %34 = vector.load %arg7[%c0_20, %c0_21] : memref<8x64xf32, #tpu.memory_space<vmem>>, vector<8x64xf32>
    %c0_22 = arith.constant 0 : index
    %c0_23 = arith.constant 0 : index
    %35 = vector.load %arg17[%c0_22, %c0_23] : memref<9x64xf32, #tpu.memory_space<vmem>>, vector<8x64xf32>
    tpu.vector_store %arg17[%c0_22, %c0_23], %34 {strides = array<i32>} : memref<9x64xf32, #tpu.memory_space<vmem>>, vector<8x64xf32>,
    %c0_24 = arith.constant 0 : index
    %c0_25 = arith.constant 0 : index
    %36 = vector.load %arg8[%c0_24, %c0_25] : memref<8x64xf32, #tpu.memory_space<vmem>>, vector<8x64xf32>
    %c0_26 = arith.constant 0 : index
    %c0_27 = arith.constant 0 : index
    %37 = vector.load %arg18[%c0_26, %c0_27] : memref<9x64xf32, #tpu.memory_space<vmem>>, vector<8x64xf32>
    tpu.vector_store %arg18[%c0_26, %c0_27], %36 {strides = array<i32>} : memref<9x64xf32, #tpu.memory_space<vmem>>, vector<8x64xf32>,
    %c8 = arith.constant 8 : index
    %c0_28 = arith.constant 0 : index
    %38 = vector.load %arg17[%c8, %c0_28] : memref<9x64xf32, #tpu.memory_space<vmem>>, vector<1x64xf32>
    tpu.vector_store %arg17[%c8, %c0_28], %33 {strides = array<i32>} : memref<9x64xf32, #tpu.memory_space<vmem>>, vector<1x64xf32>,
    %c8_29 = arith.constant 8 : index
    %c0_30 = arith.constant 0 : index
    %39 = vector.load %arg18[%c8_29, %c0_30] : memref<9x64xf32, #tpu.memory_space<vmem>>, vector<1x64xf32>
    tpu.vector_store %arg18[%c8_29, %c0_30], %23 {strides = array<i32>} : memref<9x64xf32, #tpu.memory_space<vmem>>, vector<1x64xf32>,
    %c0_31 = arith.constant 0 : index
    %c0_32 = arith.constant 0 : index
    %40 = vector.load %arg17[%c0_31, %c0_32] : memref<9x64xf32, #tpu.memory_space<vmem>>, vector<9x64xf32>
    %c0_33 = arith.constant 0 : index
    %c0_34 = arith.constant 0 : index
    %41 = vector.load %arg18[%c0_33, %c0_34] : memref<9x64xf32, #tpu.memory_space<vmem>>, vector<9x64xf32>
    %42 = vector.extract_strided_slice %28 {offsets = [0, 0], sizes = [1, 32], strides = [1, 1]} : vector<1x128xf32> to vector<1x32xf32>
    %43 = vector.extract_strided_slice %28 {offsets = [0, 32], sizes = [1, 32], strides = [1, 1]} : vector<1x128xf32> to vector<1x32xf32>
    %44 = tpu.concatenate %42, %43 in 0 : vector<1x32xf32>, vector<1x32xf32> -> vector<2x32xf32>
    %45 = vector.extract_strided_slice %40 {offsets = [0, 0], sizes = [9, 32], strides = [1, 1]} : vector<9x64xf32> to vector<9x32xf32>
    %cst_35 = arith.constant dense<0.000000e+00> : vector<2x9xf32>
    %46 = tpu.matmul %44, %45, %cst_35 {dimension_numbers = #tpu.dot_dimension_numbers<[1], [1], [0], [0], [0, 0, 1, 0], [], []>} : vector<2x32xf32>, vector<9x32xf32>, vector<2x9xf32> -> vector<2x9xf32>
    %cst_36 = arith.constant 0.176776692 : f32
    %47 = vector.broadcast %cst_36 : f32 to vector<2x9xf32>
    %48 = arith.mulf %46, %47 : vector<2x9xf32>
    %49 = vector.extract_strided_slice %28 {offsets = [0, 64], sizes = [1, 32], strides = [1, 1]} : vector<1x128xf32> to vector<1x32xf32>
    %50 = vector.extract_strided_slice %28 {offsets = [0, 96], sizes = [1, 32], strides = [1, 1]} : vector<1x128xf32> to vector<1x32xf32>
    %51 = tpu.concatenate %49, %50 in 0 : vector<1x32xf32>, vector<1x32xf32> -> vector<2x32xf32>
    %52 = vector.extract_strided_slice %40 {offsets = [0, 32], sizes = [9, 32], strides = [1, 1]} : vector<9x64xf32> to vector<9x32xf32>
    %cst_37 = arith.constant dense<0.000000e+00> : vector<2x9xf32>
    %53 = tpu.matmul %51, %52, %cst_37 {dimension_numbers = #tpu.dot_dimension_numbers<[1], [1], [0], [0], [0, 0, 1, 0], [], []>} : vector<2x32xf32>, vector<9x32xf32>, vector<2x9xf32> -> vector<2x9xf32>
    %cst_38 = arith.constant 0.176776692 : f32
    %54 = vector.broadcast %cst_38 : f32 to vector<2x9xf32>
    %55 = arith.mulf %53, %54 : vector<2x9xf32>
    %56 = tpu.concatenate %48, %55 in 0 : vector<2x9xf32>, vector<2x9xf32> -> vector<4x9xf32>
    %57 = vector.broadcast %1 : vector<1x9xf32> to vector<4x9xf32>
    %58 = arith.addf %56, %57 : vector<4x9xf32>
    %cst_39 = arith.constant dense<0xFF800000> : vector<4xf32>
    %59 = vector.multi_reduction <maximumf>, %58, %cst_39 [1] : vector<4x9xf32> to vector<4xf32>
    %60 = vector.shape_cast %59 : vector<4xf32> to vector<4x1xf32>
    %61 = vector.broadcast %60 : vector<4x1xf32> to vector<4x9xf32>
    %62 = arith.subf %58, %61 : vector<4x9xf32>
    %63 = math.exp %62 : vector<4x9xf32>
    %cst_40 = arith.constant dense<0.000000e+00> : vector<4xf32>
    %64 = vector.multi_reduction <add>, %63, %cst_40 [1] : vector<4x9xf32> to vector<4xf32>
    %65 = vector.shape_cast %64 : vector<4xf32> to vector<4x1xf32>
    %66 = tpu.reciprocal %65 {approx = true} : vector<4x1xf32> -> vector<4x1xf32>
    %67 = vector.broadcast %66 : vector<4x1xf32> to vector<4x9xf32>
    %68 = arith.mulf %63, %67 : vector<4x9xf32>
    %69 = vector.extract_strided_slice %41 {offsets = [0, 0], sizes = [9, 32], strides = [1, 1]} : vector<9x64xf32> to vector<9x32xf32>
    %70 = vector.extract_strided_slice %68 {offsets = [0, 0], sizes = [2, 9], strides = [1, 1]} : vector<4x9xf32> to vector<2x9xf32>
    %cst_41 = arith.constant dense<0.000000e+00> : vector<2x32xf32>
    %71 = tpu.matmul %70, %69, %cst_41 {dimension_numbers = #tpu.dot_dimension_numbers<[1], [0], [0], [1], [0, 0, 1, 1], [], []>} : vector<2x9xf32>, vector<9x32xf32>, vector<2x32xf32> -> vector<2x32xf32>
    %72 = vector.extract_strided_slice %71 {offsets = [0, 0], sizes = [1, 32], strides = [1, 1]} : vector<2x32xf32> to vector<1x32xf32>
    %73 = vector.extract_strided_slice %71 {offsets = [1, 0], sizes = [1, 32], strides = [1, 1]} : vector<2x32xf32> to vector<1x32xf32>
    %74 = vector.extract_strided_slice %41 {offsets = [0, 32], sizes = [9, 32], strides = [1, 1]} : vector<9x64xf32> to vector<9x32xf32>
    %75 = vector.extract_strided_slice %68 {offsets = [2, 0], sizes = [2, 9], strides = [1, 1]} : vector<4x9xf32> to vector<2x9xf32>
    %cst_42 = arith.constant dense<0.000000e+00> : vector<2x32xf32>
    %76 = tpu.matmul %75, %74, %cst_42 {dimension_numbers = #tpu.dot_dimension_numbers<[1], [0], [0], [1], [0, 0, 1, 1], [], []>} : vector<2x9xf32>, vector<9x32xf32>, vector<2x32xf32> -> vector<2x32xf32>
    %77 = vector.extract_strided_slice %76 {offsets = [0, 0], sizes = [1, 32], strides = [1, 1]} : vector<2x32xf32> to vector<1x32xf32>
    %78 = vector.extract_strided_slice %76 {offsets = [1, 0], sizes = [1, 32], strides = [1, 1]} : vector<2x32xf32> to vector<1x32xf32>
    %79 = tpu.concatenate %72, %73, %77, %78 in 1 : vector<1x32xf32>, vector<1x32xf32>, vector<1x32xf32>, vector<1x32xf32> -> vector<1x128xf32>
    %80 = arith.truncf %79 : vector<1x128xf32> to vector<1x128xbf16>
    %c0_43 = arith.constant 0 : index
    %c0_44 = arith.constant 0 : index
    %81 = vector.load %arg12[%c0_43, %c0_44] : memref<128x128xbf16, #tpu.memory_space<vmem>>, vector<128x128xbf16>
    %cst_45 = arith.constant dense<0.000000e+00> : vector<1x128xf32>
    %82 = tpu.matmul %80, %81, %cst_45 {dimension_numbers = #tpu.dot_dimension_numbers<[1], [0], [0], [1], [0, 0, 1, 1], [], []>} : vector<1x128xbf16>, vector<128x128xbf16>, vector<1x128xf32> -> vector<1x128xf32>
    %83 = arith.addf %0, %82 : vector<1x128xf32>
    %c0_46 = arith.constant 0 : index
    %c0_47 = arith.constant 0 : index
    %84 = vector.load %arg13[%c0_46, %c0_47] : memref<1x128xf32, #tpu.memory_space<vmem>>, vector<1x128xf32>
    %85 = arith.mulf %83, %83 : vector<1x128xf32>
    %cst_48 = arith.constant dense<0.000000e+00> : vector<1xf32>
    %86 = vector.multi_reduction <add>, %85, %cst_48 [1] : vector<1x128xf32> to vector<1xf32>
    %87 = vector.shape_cast %86 : vector<1xf32> to vector<1x1xf32>
    %cst_49 = arith.constant 1.280000e+02 : f32
    %88 = vector.broadcast %cst_49 : f32 to vector<1x1xf32>
    %89 = arith.divf %87, %88 : vector<1x1xf32>
    %cst_50 = arith.constant 9.99999997E-7 : f32
    %90 = vector.broadcast %cst_50 : f32 to vector<1x1xf32>
    %91 = arith.addf %89, %90 : vector<1x1xf32>
    %92 = math.rsqrt %91 : vector<1x1xf32>
    %93 = vector.broadcast %92 : vector<1x1xf32> to vector<1x128xf32>
    %94 = arith.mulf %83, %93 : vector<1x128xf32>
    %95 = arith.mulf %94, %84 : vector<1x128xf32>
    %96 = arith.truncf %95 : vector<1x128xf32> to vector<1x128xbf16>
    %c0_51 = arith.constant 0 : index
    %c0_52 = arith.constant 0 : index
    %97 = vector.load %arg14[%c0_51, %c0_52] : memref<128x512xbf16, #tpu.memory_space<vmem>>, vector<128x512xbf16>
    %cst_53 = arith.constant dense<0.000000e+00> : vector<1x512xf32>
    %98 = tpu.matmul %96, %97, %cst_53 {dimension_numbers = #tpu.dot_dimension_numbers<[1], [0], [0], [1], [0, 0, 1, 1], [], []>} : vector<1x128xbf16>, vector<128x512xbf16>, vector<1x512xf32> -> vector<1x512xf32>
    %99 = vector.extract_strided_slice %98 {offsets = [0, 0], sizes = [1, 256], strides = [1, 1]} : vector<1x512xf32> to vector<1x256xf32>
    %100 = vector.extract_strided_slice %98 {offsets = [0, 256], sizes = [1, 256], strides = [1, 1]} : vector<1x512xf32> to vector<1x256xf32>
    %101 = arith.negf %99 : vector<1x256xf32>
    %102 = math.exp %101 : vector<1x256xf32>
    %cst_54 = arith.constant 1.000000e+00 : f32
    %103 = vector.broadcast %cst_54 : f32 to vector<1x256xf32>
    %104 = arith.addf %103, %102 : vector<1x256xf32>
    %105 = arith.divf %103, %104 : vector<1x256xf32>
    %106 = arith.mulf %99, %105 : vector<1x256xf32>
    %107 = arith.mulf %106, %100 : vector<1x256xf32>
    %108 = arith.truncf %107 : vector<1x256xf32> to vector<1x256xbf16>
    %c0_55 = arith.constant 0 : index
    %c0_56 = arith.constant 0 : index
    %109 = vector.load %arg15[%c0_55, %c0_56] : memref<256x128xbf16, #tpu.memory_space<vmem>>, vector<256x128xbf16>
    %cst_57 = arith.constant dense<0.000000e+00> : vector<1x128xf32>
    %110 = tpu.matmul %108, %109, %cst_57 {dimension_numbers = #tpu.dot_dimension_numbers<[1], [0], [0], [1], [0, 0, 1, 1], [], []>} : vector<1x256xbf16>, vector<256x128xbf16>, vector<1x128xf32> -> vector<1x128xf32>
    %111 = arith.addf %83, %110 : vector<1x128xf32>
    %c0_58 = arith.constant 0 : index
    %c0_59 = arith.constant 0 : index
    %112 = vector.load %arg16[%c0_58, %c0_59] : memref<1x128xf32, #tpu.memory_space<vmem>>, vector<1x128xf32>
    tpu.vector_store %arg16[%c0_58, %c0_59], %111 {strides = array<i32>} : memref<1x128xf32, #tpu.memory_space<vmem>>, vector<1x128xf32>,
    return
  }
  func.func @transform_0(%arg0: i32) -> (i32, i32) {
    %c0_i32 = arith.constant 0 : i32
    %c0_i32_0 = arith.constant 0 : i32
    %c0_i32_1 = arith.constant 0 : i32
    return %c0_i32, %c0_i32_0 : i32, i32
  }
  func.func @transform_1(%arg0: i32) -> (i32, i32) {
    %c0_i32 = arith.constant 0 : i32
    %c0_i32_0 = arith.constant 0 : i32
    %c0_i32_1 = arith.constant 0 : i32
    return %c0_i32, %c0_i32_0 : i32, i32
  }
  func.func @transform_2(%arg0: i32) -> (i32, i32) {
    %c0_i32 = arith.constant 0 : i32
    %c0_i32_0 = arith.constant 0 : i32
    %c0_i32_1 = arith.constant 0 : i32
    return %c0_i32, %c0_i32_0 : i32, i32
  }
  func.func @transform_3(%arg0: i32) -> (i32, i32) {
    %c0_i32 = arith.constant 0 : i32
    %c0_i32_0 = arith.constant 0 : i32
    %c0_i32_1 = arith.constant 0 : i32
    return %c0_i32, %c0_i32_0 : i32, i32
  }
  func.func @transform_4(%arg0: i32) -> (i32, i32) {
    %c0_i32 = arith.constant 0 : i32
    %c0_i32_0 = arith.constant 0 : i32
    %c0_i32_1 = arith.constant 0 : i32
    return %c0_i32, %c0_i32_0 : i32, i32
  }
  func.func @transform_5(%arg0: i32) -> (i32, i32) {
    %c0_i32 = arith.constant 0 : i32
    %c0_i32_0 = arith.constant 0 : i32
    %c0_i32_1 = arith.constant 0 : i32
    return %c0_i32, %c0_i32_0 : i32, i32
  }
  func.func @transform_6(%arg0: i32) -> (i32, i32) {
    %c0_i32 = arith.constant 0 : i32
    %c0_i32_0 = arith.constant 0 : i32
    %c0_i32_1 = arith.constant 0 : i32
    return %c0_i32, %c0_i32_0 : i32, i32
  }
  func.func @transform_7(%arg0: i32) -> (i32, i32) {
    %c0_i32 = arith.constant 0 : i32
    %c0_i32_0 = arith.constant 0 : i32
    %c0_i32_1 = arith.constant 0 : i32
    return %c0_i32, %c0_i32_0 : i32, i32
  }
  func.func @transform_8(%arg0: i32) -> (i32, i32) {
    %c0_i32 = arith.constant 0 : i32
    %c0_i32_0 = arith.constant 0 : i32
    %c0_i32_1 = arith.constant 0 : i32
    return %c0_i32, %c0_i32_0 : i32, i32
  }
  func.func @transform_9(%arg0: i32) -> (i32, i32) {
    %c0_i32 = arith.constant 0 : i32
    %c0_i32_0 = arith.constant 0 : i32
    %c0_i32_1 = arith.constant 0 : i32
    return %c0_i32, %c0_i32_0 : i32, i32
  }
  func.func @transform_10(%arg0: i32) -> (i32, i32) {
    %c0_i32 = arith.constant 0 : i32
    %c0_i32_0 = arith.constant 0 : i32
    %c0_i32_1 = arith.constant 0 : i32
    return %c0_i32, %c0_i32_0 : i32, i32
  }
  func.func @transform_11(%arg0: i32) -> (i32, i32) {
    %c0_i32 = arith.constant 0 : i32
    %c0_i32_0 = arith.constant 0 : i32
    %c0_i32_1 = arith.constant 0 : i32
    return %c0_i32, %c0_i32_0 : i32, i32
  }
  func.func @transform_12(%arg0: i32) -> (i32, i32) {
    %c0_i32 = arith.constant 0 : i32
    %c0_i32_0 = arith.constant 0 : i32
    %c0_i32_1 = arith.constant 0 : i32
    return %c0_i32, %c0_i32_0 : i32, i32
  }
  func.func @transform_13(%arg0: i32) -> (i32, i32) {
    %c0_i32 = arith.constant 0 : i32
    %c0_i32_0 = arith.constant 0 : i32
    %c0_i32_1 = arith.constant 0 : i32
    return %c0_i32, %c0_i32_0 : i32, i32
  }
  func.func @transform_14(%arg0: i32) -> (i32, i32) {
    %c0_i32 = arith.constant 0 : i32
    %c0_i32_0 = arith.constant 0 : i32
    %c0_i32_1 = arith.constant 0 : i32
    return %c0_i32, %c0_i32_0 : i32, i32
  }
  func.func @transform_15(%arg0: i32) -> (i32, i32) {
    %c0_i32 = arith.constant 0 : i32
    %c0_i32_0 = arith.constant 0 : i32
    %c0_i32_1 = arith.constant 0 : i32
    return %c0_i32, %c0_i32_0 : i32, i32
  }
  func.func @transform_16(%arg0: i32) -> (i32, i32) {
    %c0_i32 = arith.constant 0 : i32
    %c0_i32_0 = arith.constant 0 : i32
    %c0_i32_1 = arith.constant 0 : i32
    return %c0_i32, %c0_i32_0 : i32, i32
  }
  func.func @transform_17(%arg0: i32) -> (i32, i32) {
    %c0_i32 = arith.constant 0 : i32
    %c0_i32_0 = arith.constant 0 : i32
    %c0_i32_1 = arith.constant 0 : i32
    return %c0_i32, %c0_i32_0 : i32, i32
  }
}

</mosaic_0001>

<llo_original>
// kernel: block_cache_forward.1
$region0: #{block_cache_forward.1}
  #allocation0 [shape = 'u32[]', space=smem, size = 0x4, offset = 0x4, fixed_abs, tag = 'smem constant byte address 0x4 - core index']
  #allocation1 [shape = 'u32[72,128]{1,0:T(1,128)}', space=vmem, size = 0x9000, scoped, tag = 'internal scratch']
  %s0 = inlined_call_operand.vmem [shape: f32[1,128], index: 0, kind: input, shape index: {}]
  %s1 = inlined_call_operand.vmem [shape: f32[1,128], index: 1, kind: input, shape index: {}]
  %s2 = inlined_call_operand.vmem [shape: f32[1,128], index: 2, kind: input, shape index: {}]
  %s3 = inlined_call_operand.vmem [shape: f32[1,64], index: 3, kind: input, shape index: {}]
  %s4 = inlined_call_operand.vmem [shape: f32[1,64], index: 4, kind: input, shape index: {}]
  %s5 = inlined_call_operand.vmem [shape: f32[1,9], index: 5, kind: input, shape index: {}]
  %s6 = inlined_call_operand.vmem [shape: f32[8,64], index: 6, kind: input, shape index: {}]
  %s7 = inlined_call_operand.vmem [shape: f32[8,64], index: 7, kind: input, shape index: {}]
  %s8 = inlined_call_operand.vmem [shape: f32[1,128], index: 8, kind: input, shape index: {}]
  %s9 = inlined_call_operand.vmem [shape: bf16[128,448], index: 9, kind: input, shape index: {}]
  %s10 = inlined_call_operand.vmem [shape: f32[1,448], index: 10, kind: input, shape index: {}]
  %s11 = inlined_call_operand.vmem [shape: bf16[128,128], index: 11, kind: input, shape index: {}]
  %s12 = inlined_call_operand.vmem [shape: f32[1,128], index: 12, kind: input, shape index: {}]
  %s13 = inlined_call_operand.vmem [shape: bf16[128,512], index: 13, kind: input, shape index: {}]
  %s14 = inlined_call_operand.vmem [shape: bf16[256,128], index: 14, kind: input, shape index: {}]
  %s15 = inlined_call_operand.hbm [shape: f32[1,128], index: 15, kind: output, shape index: {0}]
  %s16 = inlined_call_operand.vmem [shape: f32[9,64], index: 16, kind: output, shape index: {1}]
  %s17 = inlined_call_operand.vmem [shape: f32[9,64], index: 17, kind: output, shape index: {2}]
  %18 = xla_tuple %s15, %s16, %s17
  %s19 = sld [smem:[#allocation0]]
  $region86: #{block_cache_forward.1} parent=0
    _
  %s21 = ssub.s32 1, %s19
  %s22 = scalar_select 0, %s21, %s19
  $region1: #{block_cache_forward.1} parent=0
    #allocation2 [shape = 'u8[512]{0}', space=vmem, size = 0x400, scoped, tag = 'output window, operand 0, single buffered']
    #allocation3 [shape = 's32[1]{0}', space=sflag, size = 0x4, scoped, tag = 'scoped memory for block_cache_forward.1']
    %23 = vsyncpa [#allocation3], 0
    // Predicated region
    $region2: #{block_cache_forward.1} parent=1 // pred_check
      _
    $region3: #{block_cache_forward.1} parent=1 // pred_check_branch
      %25 = sbr.rel (0) target = $region5
    $region4: #{block_cache_forward.1} parent=1 // pred_region
      _
    $region5: #{block_cache_forward.1} parent=1 // pred_fallthru
      _
    // Predicated region
    $region6: #{block_cache_forward.1} parent=1 // pred_check
      _
    $region7: #{block_cache_forward.1} parent=1 // pred_check_branch
      %27 = sbr.rel (0) target = $region9
    $region8: #{block_cache_forward.1} parent=1 // pred_region
      _
    $region9: #{block_cache_forward.1} parent=1 // pred_fallthru
      _
    // Predicated region
    $region10: #{block_cache_forward.1} parent=1 // pred_check
      _
    $region11: #{block_cache_forward.1} parent=1 // pred_check_branch
      %29 = sbr.rel (0) target = $region13
    $region12: #{block_cache_forward.1} parent=1 // pred_region
      _
    $region13: #{block_cache_forward.1} parent=1 // pred_fallthru
      _
    // Predicated region
    $region14: #{block_cache_forward.1} parent=1 // pred_check
      _
    $region15: #{block_cache_forward.1} parent=1 // pred_check_branch
      %31 = sbr.rel (0) target = $region17
    $region16: #{block_cache_forward.1} parent=1 // pred_region
      _
    $region17: #{block_cache_forward.1} parent=1 // pred_fallthru
      _
    // Predicated region
    $region18: #{block_cache_forward.1} parent=1 // pred_check
      _
    $region19: #{block_cache_forward.1} parent=1 // pred_check_branch
      %33 = sbr.rel (0) target = $region21
    $region20: #{block_cache_forward.1} parent=1 // pred_region
      _
    $region21: #{block_cache_forward.1} parent=1 // pred_fallthru
      _
    // Predicated region
    $region22: #{block_cache_forward.1} parent=1 // pred_check
      _
    $region23: #{block_cache_forward.1} parent=1 // pred_check_branch
      %35 = sbr.rel (0) target = $region25
    $region24: #{block_cache_forward.1} parent=1 // pred_region
      _
    $region25: #{block_cache_forward.1} parent=1 // pred_fallthru
      _
    // Predicated region
    $region26: #{block_cache_forward.1} parent=1 // pred_check
      _
    $region27: #{block_cache_forward.1} parent=1 // pred_check_branch
      %37 = sbr.rel (0) target = $region29
    $region28: #{block_cache_forward.1} parent=1 // pred_region
      _
    $region29: #{block_cache_forward.1} parent=1 // pred_fallthru
      _
    // Predicated region
    $region30: #{block_cache_forward.1} parent=1 // pred_check
      _
    $region31: #{block_cache_forward.1} parent=1 // pred_check_branch
      %39 = sbr.rel (0) target = $region33
    $region32: #{block_cache_forward.1} parent=1 // pred_region
      _
    $region33: #{block_cache_forward.1} parent=1 // pred_fallthru
      _
    // Predicated region
    $region34: #{block_cache_forward.1} parent=1 // pred_check
      _
    $region35: #{block_cache_forward.1} parent=1 // pred_check_branch
      %41 = sbr.rel (0) target = $region37
    $region36: #{block_cache_forward.1} parent=1 // pred_region
      _
    $region37: #{block_cache_forward.1} parent=1 // pred_fallthru
      _
    // Predicated region
    $region38: #{block_cache_forward.1} parent=1 // pred_check
      _
    $region39: #{block_cache_forward.1} parent=1 // pred_check_branch
      %43 = sbr.rel (0) target = $region41
    $region40: #{block_cache_forward.1} parent=1 // pred_region
      _
    $region41: #{block_cache_forward.1} parent=1 // pred_fallthru
      _
    // Predicated region
    $region42: #{block_cache_forward.1} parent=1 // pred_check
      _
    $region43: #{block_cache_forward.1} parent=1 // pred_check_branch
      %45 = sbr.rel (0) target = $region45
    $region44: #{block_cache_forward.1} parent=1 // pred_region
      _
    $region45: #{block_cache_forward.1} parent=1 // pred_fallthru
      _
    // Predicated region
    $region46: #{block_cache_forward.1} parent=1 // pred_check
      _
    $region47: #{block_cache_forward.1} parent=1 // pred_check_branch
      %47 = sbr.rel (0) target = $region49
    $region48: #{block_cache_forward.1} parent=1 // pred_region
      _
    $region49: #{block_cache_forward.1} parent=1 // pred_fallthru
      _
    // Predicated region
    $region50: #{block_cache_forward.1} parent=1 // pred_check
      _
    $region51: #{block_cache_forward.1} parent=1 // pred_check_branch
      %49 = sbr.rel (0) target = $region53
    $region52: #{block_cache_forward.1} parent=1 // pred_region
      _
    $region53: #{block_cache_forward.1} parent=1 // pred_fallthru
      _
    // Predicated region
    $region54: #{block_cache_forward.1} parent=1 // pred_check
      _
    $region55: #{block_cache_forward.1} parent=1 // pred_check_branch
      %51 = sbr.rel (0) target = $region57
    $region56: #{block_cache_forward.1} parent=1 // pred_region
      _
    $region57: #{block_cache_forward.1} parent=1 // pred_fallthru
      _
    // Predicated region
    $region58: #{block_cache_forward.1} parent=1 // pred_check
      _
    $region59: #{block_cache_forward.1} parent=1 // pred_check_branch
      %53 = sbr.rel (0) target = $region61
    $region60: #{block_cache_forward.1} parent=1 // pred_region
      _
    $region61: #{block_cache_forward.1} parent=1 // pred_fallthru
      _
    %v54 = vld [vmem:[%s0] sm:$0x1]
    %v55 = vld [vmem:[%s5] sm:$0x1]
    %v56 = vld [vmem:[%s8] sm:$0x1]
    %v57 = vmul.f32 %v54, %v54
    %vm58 = vcmask 1040384
    %v59 = vsel %vm58, %v57, 0.0
    %60 = vadd.xlane.f32.xlu0 %v59
    %v61 = vpop.xlane.xlu0 %60
    %v62 = vrcp.pop 128.0
    %v63 = vmul.f32 128.0, %v62
    %v64 = vsub.f32 1.0, %v63
    %v65 = vmul.f32 %v62, %v64
    %v66 = vadd.f32 %v62, %v65
    %vm67 = vweird.f32 %v62
    %v68 = vsel %vm67, %v62, %v66
    %v69 = vmul.f32 %v61, %v68
    %v70 = vadd.f32 %v69, 1e-06
    %v71 = vrsqrt.pop %v70
    %v72 = vmul.f32 %v71, %v70
    %v73 = vmul.f32 %v72, %v71
    %v74 = vmul.f32 0.5, %v73
    %v75 = vsub.f32 1.5, %v74
    %v76 = vmul.f32 %v71, %v75
    %vm77 = vweird.f32 %v70
    %vm78 = vweird.f32 %v71
    %vm79 = vmor %vm77, %vm78
    %v80 = vsel %vm79, %v71, %v76
    %v81 = vmul.f32 %v54, %v80
    %v82 = vmul.f32 %v81, %v56
    %v83 = vpack.c.bf16 %v82, %v82
    %v84 = vld [vmem:[%s9] sm:$0xff]
    %v85 = vld [vmem:[%s9 + $0x8] sm:$0xff]
    %v86 = vld [vmem:[%s9 + $0x10] sm:$0xff]
    %v87 = vld [vmem:[%s9 + $0x18] sm:$0xff]
    %v88 = vld [vmem:[%s9 + $0x20] sm:$0xff]
    %v89 = vld [vmem:[%s9 + $0x28] sm:$0xff]
    %v90 = vld [vmem:[%s9 + $0x30] sm:$0xff]
    %v91 = vld [vmem:[%s9 + $0x38] sm:$0xff]
    %v92 = vld [vmem:[%s9 + $0x40] sm:$0xff]
    %v93 = vld [vmem:[%s9 + $0x48] sm:$0xff]
    %v94 = vld [vmem:[%s9 + $0x50] sm:$0xff]
    %v95 = vld [vmem:[%s9 + $0x58] sm:$0xff]
    %v96 = vld [vmem:[%s9 + $0x60] sm:$0xff]
    %v97 = vld [vmem:[%s9 + $0x68] sm:$0xff]
    %v98 = vld [vmem:[%s9 + $0x70] sm:$0xff]
    %v99 = vld [vmem:[%s9 + $0x78] sm:$0xff]
    %v100 = vld [vmem:[%s9 + $0x80] sm:$0xff]
    %v101 = vld [vmem:[%s9 + $0x88] sm:$0xff]
    %v102 = vld [vmem:[%s9 + $0x90] sm:$0xff]
    %v103 = vld [vmem:[%s9 + $0x98] sm:$0xff]
    %v104 = vld [vmem:[%s9 + $0xa0] sm:$0xff]
    %v105 = vld [vmem:[%s9 + $0xa8] sm:$0xff]
    %v106 = vld [vmem:[%s9 + $0xb0] sm:$0xff]
    %v107 = vld [vmem:[%s9 + $0xb8] sm:$0xff]
    %v108 = vld [vmem:[%s9 + $0xc0] sm:$0xff]
    %v109 = vld [vmem:[%s9 + $0xc8] sm:$0xff]
    %v110 = vld [vmem:[%s9 + $0xd0] sm:$0xff]
    %v111 = vld [vmem:[%s9 + $0xd8] sm:$0xff]
    %v112 = vld [vmem:[%s9 + $0xe0] sm:$0xff]
    %v113 = vld [vmem:[%s9 + $0xe8] sm:$0xff]
    %v114 = vld [vmem:[%s9 + $0xf0] sm:$0xff]
    %v115 = vld [vmem:[%s9 + $0xf8] sm:$0xff]
    %v116 = vld [vmem:[%s10] sm:$0xf]
    %v149 = vunpack.c.l.b16 %v84
    %v150 = vunpack.c.h.b16 %v84
    %v151 = vunpack.c.l.b16 %v85
    %v152 = vunpack.c.h.b16 %v85
    %v153 = vunpack.c.l.b16 %v86
    %v154 = vunpack.c.h.b16 %v86
    %v155 = vunpack.c.l.b16 %v87
    %v156 = vunpack.c.h.b16 %v87
    %v157 = vunpack.c.l.b16 %v88
    %v158 = vunpack.c.h.b16 %v88
    %v159 = vunpack.c.l.b16 %v89
    %v160 = vunpack.c.h.b16 %v89
    %v161 = vunpack.c.l.b16 %v90
    %v162 = vunpack.c.h.b16 %v90
    %v163 = vunpack.c.l.b16 %v91
    %v164 = vunpack.c.h.b16 %v91
    %v165 = vunpack.c.l.b16 %v92
    %v166 = vunpack.c.h.b16 %v92
    %v167 = vunpack.c.l.b16 %v93
    %v168 = vunpack.c.h.b16 %v93
    %v169 = vunpack.c.l.b16 %v94
    %v170 = vunpack.c.h.b16 %v94
    %v171 = vunpack.c.l.b16 %v95
    %v172 = vunpack.c.h.b16 %v95
    %v173 = vunpack.c.l.b16 %v96
    %v174 = vunpack.c.h.b16 %v96
    %v175 = vunpack.c.l.b16 %v97
    %v176 = vunpack.c.h.b16 %v97
    %v177 = vunpack.c.l.b16 %v98
    %v178 = vunpack.c.h.b16 %v98
    %v179 = vunpack.c.l.b16 %v99
    %v180 = vunpack.c.h.b16 %v99
    %v181 = vunpack.c.l.b16 %v100
    %v182 = vunpack.c.h.b16 %v100
    %v183 = vunpack.c.l.b16 %v101
    %v184 = vunpack.c.h.b16 %v101
    %v185 = vunpack.c.l.b16 %v102
    %v186 = vunpack.c.h.b16 %v102
    %v187 = vunpack.c.l.b16 %v103
    %v188 = vunpack.c.h.b16 %v103
    %v189 = vunpack.c.l.b16 %v104
    %v190 = vunpack.c.h.b16 %v104
    %v191 = vunpack.c.l.b16 %v105
    %v192 = vunpack.c.h.b16 %v105
    %v193 = vunpack.c.l.b16 %v106
    %v194 = vunpack.c.h.b16 %v106
    %v195 = vunpack.c.l.b16 %v107
    %v196 = vunpack.c.h.b16 %v107
    %v197 = vunpack.c.l.b16 %v108
    %v198 = vunpack.c.h.b16 %v108
    %v199 = vunpack.c.l.b16 %v109
    %v200 = vunpack.c.h.b16 %v109
    %v201 = vunpack.c.l.b16 %v110
    %v202 = vunpack.c.h.b16 %v110
    %v203 = vunpack.c.l.b16 %v111
    %v204 = vunpack.c.h.b16 %v111
    %v205 = vunpack.c.l.b16 %v112
    %v206 = vunpack.c.h.b16 %v112
    %v207 = vunpack.c.l.b16 %v113
    %v208 = vunpack.c.h.b16 %v113
    %v209 = vunpack.c.l.b16 %v114
    %v210 = vunpack.c.h.b16 %v114
    %v211 = vunpack.c.l.b16 %v115
    %v212 = vunpack.c.h.b16 %v115
    %v213 = vpack.c.b16 %v153, %v149
    %v214 = vpack.c.b16 %v154, %v150
    %v215 = vpack.c.b16 %v155, %v151
    %v216 = vpack.c.b16 %v156, %v152
    %v217 = vpack.c.b16 %v161, %v157
    %v218 = vpack.c.b16 %v162, %v158
    %v219 = vpack.c.b16 %v163, %v159
    %v220 = vpack.c.b16 %v164, %v160
    %v221 = vpack.c.b16 %v169, %v165
    %v222 = vpack.c.b16 %v170, %v166
    %v223 = vpack.c.b16 %v171, %v167
    %v224 = vpack.c.b16 %v172, %v168
    %v225 = vpack.c.b16 %v177, %v173
    %v226 = vpack.c.b16 %v178, %v174
    %v227 = vpack.c.b16 %v179, %v175
    %v228 = vpack.c.b16 %v180, %v176
    %v229 = vpack.c.b16 %v185, %v181
    %v230 = vpack.c.b16 %v186, %v182
    %v231 = vpack.c.b16 %v187, %v183
    %v232 = vpack.c.b16 %v188, %v184
    %v233 = vpack.c.b16 %v193, %v189
    %v234 = vpack.c.b16 %v194, %v190
    %v235 = vpack.c.b16 %v195, %v191
    %v236 = vpack.c.b16 %v196, %v192
    %v237 = vpack.c.b16 %v201, %v197
    %v238 = vpack.c.b16 %v202, %v198
    %v239 = vpack.c.b16 %v203, %v199
    %v240 = vpack.c.b16 %v204, %v200
    %v241 = vpack.c.b16 %v209, %v205
    %v242 = vpack.c.b16 %v210, %v206
    %v243 = vpack.c.b16 %v211, %v207
    %v244 = vpack.c.b16 %v212, %v208
    %v278 = vperm.slane %v116, 0
    %v279 = vperm.slane %v116, 1
    %v280 = vperm.slane %v116, 2
    %v281 = vperm.slane %v116, 3
    %286 = vmatpush.bf16.msra.mxu0 %v241
    %287 = vmatpush.bf16.msra.mxu0 %v237
    %288 = vmatpush.bf16.msra.mxu0 %v233
    %289 = vmatpush.bf16.msra.mxu0 %v229
    %290 = vmatpush.bf16.msra.mxu0 %v225
    %291 = vmatpush.bf16.msra.mxu0 %v221
    %292 = vmatpush.bf16.msra.mxu0 %v217
    %293 = vmatpush.bf16.msra.mxu0 %v213
    %294 = vmatmul.bf16.gmra.mxu0 %v83
    %v295 = vpop.f32.mrf.mxu0
    %v296 = vadd.f32 %v278, %v295
    %v297 = vpop.f32.mrf.mxu0
    %298 = vdwg.mxu0
    %299 = vmatpush.bf16.msra.mxu0 %v242
    %300 = vmatpush.bf16.msra.mxu0 %v238
    %301 = vmatpush.bf16.msra.mxu0 %v234
    %302 = vmatpush.bf16.msra.mxu0 %v230
    %303 = vmatpush.bf16.msra.mxu0 %v226
    %304 = vmatpush.bf16.msra.mxu0 %v222
    %305 = vmatpush.bf16.msra.mxu0 %v218
    %306 = vmatpush.bf16.msra.mxu0 %v214
    %307 = vmatmul.bf16.gmra.mxu0 %v83
    %v308 = vpop.f32.mrf.mxu0
    %v309 = vadd.f32 %v279, %v308
    %v310 = vpop.f32.mrf.mxu0
    %311 = vdwg.mxu0
    %312 = vmatpush.bf16.msra.mxu0 %v243
    %313 = vmatpush.bf16.msra.mxu0 %v239
    %314 = vmatpush.bf16.msra.mxu0 %v235
    %315 = vmatpush.bf16.msra.mxu0 %v231
    %316 = vmatpush.bf16.msra.mxu0 %v227
    %317 = vmatpush.bf16.msra.mxu0 %v223
    %318 = vmatpush.bf16.msra.mxu0 %v219
    %319 = vmatpush.bf16.msra.mxu0 %v215
    %320 = vmatmul.bf16.gmra.mxu0 %v83
    %v321 = vpop.f32.mrf.mxu0
    %v322 = vadd.f32 %v280, %v321
    %v323 = vpop.f32.mrf.mxu0
    %324 = vdwg.mxu0
    %325 = vmatpush.bf16.msra.mxu0 %v244
    %326 = vmatpush.bf16.msra.mxu0 %v240
    %327 = vmatpush.bf16.msra.mxu0 %v236
    %328 = vmatpush.bf16.msra.mxu0 %v232
    %329 = vmatpush.bf16.msra.mxu0 %v228
    %330 = vmatpush.bf16.msra.mxu0 %v224
    %331 = vmatpush.bf16.msra.mxu0 %v220
    %332 = vmatpush.bf16.msra.mxu0 %v216
    %333 = vmatmul.bf16.gmra.mxu0 %v83
    %v334 = vpop.f32.mrf.mxu0
    %v335 = vadd.f32 %v281, %v334
    %v336 = vpop.f32.mrf.mxu0
    %337 = vdwg.mxu0
    %v338 = vld [vmem:[%s1] sm:$0x1]
    %v339 = vmul.f32 %v296, %v338
    %v340 = vld [vmem:[%s2] sm:$0x1]
    %v341 = vmul.f32 %v309, %v340
    %v342 = vadd.f32 %v339, %v341
    %v343 = vld [vmem:[%s3] sm:$0x1]
    %v344 = vmul.f32 %v322, %v343
    %v345 = vld [vmem:[%s4] sm:$0x1]
    %v347 = vperm.slane %v345, 0
    %348 = vrot.lane.b32.xlu0 %v347, 64
    %v349 = vpop.permute.xlu0 %348
    %v351 = vmul.f32 %v322, %v349
    %353 = vrot.lane.b32.xlu0 %v351, 64
    %v354 = vpop.permute.xlu0 %353
    %v356 = vadd.f32 %v344, %v354
    %v357 = vld [vmem:[%s6] sm:$0xff]
    %vm358 = vcmask 523264
    %359 = vst.msk [vmem:[%s16] sm:$0xff] %vm358, %v357
    %v360 = vld [vmem:[%s7] sm:$0xff]
    %361 = vst.msk [vmem:[%s17] sm:$0xff] %vm358, %v360
    %vm362 = vcmask 516096
    %363 = vst.msk [vmem:[%s16 + $0x8] sm:$0x1] %vm362, %v356
    %364 = vst.msk [vmem:[%s17 + $0x8] sm:$0x1] %vm362, %v335
    %v365 = vld [vmem:[%s16] sm:$0xff]
    %v366 = vld [vmem:[%s16 + $0x8] sm:$0x1]
    %v367 = vld [vmem:[%s17] sm:$0xff]
    %v368 = vld [vmem:[%s17 + $0x8] sm:$0x1]
    %v370 = vrot.slane %v342, 7
    %371 = vrot.lane.b32.xlu0 %v370, 96
    %v372 = vpop.permute.xlu0 %371
    %v374 = vsel %vm58, %v342, %v372
    %vm375 = vcmask 261120
    %v377 = vsel %vm375, %v374, 0
    %v380 = vsel %vm375, %v365, 0
    %v383 = vsel %vm375, %v366, 0
    %385 = vmatpush.xpose.msra.mxu0 0.0
    %386 = vmatpush.xpose.msra.mxu0 0.0
    %387 = vmatpush.xpose.msra.mxu0 0.0
    %388 = vmatpush.xpose.msra.mxu0 0.0
    %389 = vmatpush.xpose.msra.mxu0 0.0
    %390 = vmatpush.xpose.msra.mxu0 0.0
    %391 = vmatpush.xpose.msra.mxu0 0.0
    %392 = vmatpush.xpose.msra.mxu0 0.0
    %393 = vmatpush.xpose.msra.mxu0 0.0
    %394 = vmatpush.xpose.msra.mxu0 0.0
    %395 = vmatpush.xpose.msra.mxu0 0.0
    %396 = vmatpush.xpose.msra.mxu0 0.0
    %397 = vmatpush.xpose.msra.mxu0 0.0
    %398 = vmatpush.xpose.msra.mxu0 0.0
    %399 = vmatpush.xpose.msra.mxu0 %v383
    %400 = vmatpush.xpose.msra.mxu0 %v380
    %401 = vmatmul.f32.gmra.mxu0 %v377
    %v402 = vpop.f32.mrf.mxu0
    %v403 = vadd.f32 0.0, %v402
    %404 = vdwg.mxu0
    %v405 = vmul.f32 %v403, 0.17677669
    %406 = vrot.lane.b32.xlu0 %v374, 64
    %v407 = vpop.permute.xlu0 %406
    %408 = vrot.lane.b32.xlu0 %v365, 96
    %v409 = vpop.permute.xlu0 %408
    %410 = vrot.lane.b32.xlu0 %v366, 96
    %v411 = vpop.permute.xlu0 %410
    %v412 = vsel %vm375, %v407, 0
    %v414 = vsel %vm375, %v409, 0
    %v416 = vsel %vm375, %v411, 0
    %418 = vmatpush.xpose.msra.mxu0 0.0
    %419 = vmatpush.xpose.msra.mxu0 0.0
    %420 = vmatpush.xpose.msra.mxu0 0.0
    %421 = vmatpush.xpose.msra.mxu0 0.0
    %422 = vmatpush.xpose.msra.mxu0 0.0
    %423 = vmatpush.xpose.msra.mxu0 0.0
    %424 = vmatpush.xpose.msra.mxu0 0.0
    %425 = vmatpush.xpose.msra.mxu0 0.0
    %426 = vmatpush.xpose.msra.mxu0 0.0
    %427 = vmatpush.xpose.msra.mxu0 0.0
    %428 = vmatpush.xpose.msra.mxu0 0.0
    %429 = vmatpush.xpose.msra.mxu0 0.0
    %430 = vmatpush.xpose.msra.mxu0 0.0
    %431 = vmatpush.xpose.msra.mxu0 0.0
    %432 = vmatpush.xpose.msra.mxu0 %v416
    %433 = vmatpush.xpose.msra.mxu0 %v414
    %434 = vmatmul.f32.gmra.mxu0 %v412
    %v435 = vpop.f32.mrf.mxu0
    %v436 = vadd.f32 0.0, %v435
    %437 = vdwg.mxu0
    %v438 = vmul.f32 %v436, 0.17677669
    %v440 = vrot.slane %v438, 6
    %vm442 = vcmask 1041408
    %v443 = vsel %vm442, %v405, %v440
    %v445 = vperm.slane %v55, 0
    %v447 = vadd.f32 %v443, %v445
    %vm448 = vcmask 68608
    %v449 = vsel %vm448, %v447, -inf
    %450 = vmax.xlane.f32.xlu0 %v449
    %v451 = vpop.xlane.xlu0 %450
    %v452 = vsub.f32 %v447, %v451
    %v453 = vmul.f32 %v452, 1.442695
    %v454 = vpow.pop %v453
    %v455 = vsel %vm448, %v454, 0.0
    %456 = vadd.xlane.f32.xlu0 %v455
    %v457 = vpop.xlane.xlu0 %456
    %v458 = vrcp.pop %v457
    %v459 = vmul.f32 %v454, %v458
    %vm460 = vcmask 72704
    %v462 = vsel %vm460, %v459, 0
    %v465 = vsel %vm58, %v368, 0
    %467 = vmatpush.msra.mxu0 0.0
    %468 = vmatpush.msra.mxu0 0.0
    %469 = vmatpush.msra.mxu0 0.0
    %470 = vmatpush.msra.mxu0 0.0
    %471 = vmatpush.msra.mxu0 0.0
    %472 = vmatpush.msra.mxu0 0.0
    %473 = vmatpush.msra.mxu0 0.0
    %474 = vmatpush.msra.mxu0 0.0
    %475 = vmatpush.msra.mxu0 0.0
    %476 = vmatpush.msra.mxu0 0.0
    %477 = vmatpush.msra.mxu0 0.0
    %478 = vmatpush.msra.mxu0 0.0
    %479 = vmatpush.msra.mxu0 0.0
    %480 = vmatpush.msra.mxu0 0.0
    %481 = vmatpush.msra.mxu0 %v465
    %482 = vmatpush.msra.mxu0 %v367
    %483 = vmatmul.f32.gmra.mxu0 %v462
    %v484 = vpop.f32.mrf.mxu0
    %v485 = vadd.f32 0.0, %v484
    %486 = vdwg.mxu0
    %v487 = vrot.slane %v459, 2
    %489 = vrot.lane.b32.xlu0 %v367, 96
    %v490 = vpop.permute.xlu0 %489
    %491 = vrot.lane.b32.xlu0 %v368, 96
    %v492 = vpop.permute.xlu0 %491
    %v494 = vsel %vm460, %v487, 0
    %v496 = vsel %vm58, %v492, 0
    %498 = vmatpush.msra.mxu0 0.0
    %499 = vmatpush.msra.mxu0 0.0
    %500 = vmatpush.msra.mxu0 0.0
    %501 = vmatpush.msra.mxu0 0.0
    %502 = vmatpush.msra.mxu0 0.0
    %503 = vmatpush.msra.mxu0 0.0
    %504 = vmatpush.msra.mxu0 0.0
    %505 = vmatpush.msra.mxu0 0.0
    %506 = vmatpush.msra.mxu0 0.0
    %507 = vmatpush.msra.mxu0 0.0
    %508 = vmatpush.msra.mxu0 0.0
    %509 = vmatpush.msra.mxu0 0.0
    %510 = vmatpush.msra.mxu0 0.0
    %511 = vmatpush.msra.mxu0 0.0
    %512 = vmatpush.msra.mxu0 %v496
    %513 = vmatpush.msra.mxu0 %v490
    %514 = vmatmul.f32.gmra.mxu0 %v494
    %v515 = vpop.f32.mrf.mxu0
    %v516 = vadd.f32 0.0, %v515
    %517 = vdwg.mxu0
    %v519 = vrot.slane %v485, 1
    %520 = vrot.lane.b32.xlu0 %v519, 32
    %v521 = vpop.permute.xlu0 %520
    %524 = vrot.lane.b32.xlu0 %v516, 64
    %v525 = vpop.permute.xlu0 %524
    %v527 = vrot.slane %v516, 1
    %528 = vrot.lane.b32.xlu0 %v527, 96
    %v529 = vpop.permute.xlu0 %528
    %v531 = vsel %vm375, %v485, %v521
    %v532 = vsel %vm358, %v531, %v525
    %vm533 = vcmask 785408
    %v534 = vsel %vm533, %v532, %v529
    %v535 = vpack.c.bf16 %v534, %v534
    %v536 = vld [vmem:[%s11] sm:$0xf]
    %v537 = vld [vmem:[%s11 + $0x4] sm:$0xf]
    %v538 = vld [vmem:[%s11 + $0x8] sm:$0xf]
    %v539 = vld [vmem:[%s11 + $0xc] sm:$0xf]
    %v540 = vld [vmem:[%s11 + $0x10] sm:$0xf]
    %v541 = vld [vmem:[%s11 + $0x14] sm:$0xf]
    %v542 = vld [vmem:[%s11 + $0x18] sm:$0xf]
    %v543 = vld [vmem:[%s11 + $0x1c] sm:$0xf]
    %v544 = vld [vmem:[%s11 + $0x20] sm:$0xf]
    %v545 = vld [vmem:[%s11 + $0x24] sm:$0xf]
    %v546 = vld [vmem:[%s11 + $0x28] sm:$0xf]
    %v547 = vld [vmem:[%s11 + $0x2c] sm:$0xf]
    %v548 = vld [vmem:[%s11 + $0x30] sm:$0xf]
    %v549 = vld [vmem:[%s11 + $0x34] sm:$0xf]
    %v550 = vld [vmem:[%s11 + $0x38] sm:$0xf]
    %v551 = vld [vmem:[%s11 + $0x3c] sm:$0xf]
    %v568 = vunpack.c.l.b16 %v536
    %v569 = vunpack.c.l.b16 %v537
    %v570 = vunpack.c.l.b16 %v538
    %v571 = vunpack.c.l.b16 %v539
    %v572 = vunpack.c.l.b16 %v540
    %v573 = vunpack.c.l.b16 %v541
    %v574 = vunpack.c.l.b16 %v542
    %v575 = vunpack.c.l.b16 %v543
    %v576 = vunpack.c.l.b16 %v544
    %v577 = vunpack.c.l.b16 %v545
    %v578 = vunpack.c.l.b16 %v546
    %v579 = vunpack.c.l.b16 %v547
    %v580 = vunpack.c.l.b16 %v548
    %v581 = vunpack.c.l.b16 %v549
    %v582 = vunpack.c.l.b16 %v550
    %v583 = vunpack.c.l.b16 %v551
    %v584 = vpack.c.b16 %v569, %v568
    %v585 = vpack.c.b16 %v571, %v570
    %v586 = vpack.c.b16 %v573, %v572
    %v587 = vpack.c.b16 %v575, %v574
    %v588 = vpack.c.b16 %v577, %v576
    %v589 = vpack.c.b16 %v579, %v578
    %v590 = vpack.c.b16 %v581, %v580
    %v591 = vpack.c.b16 %v583, %v582
    %600 = vmatpush.bf16.msra.mxu0 %v591
    %601 = vmatpush.bf16.msra.mxu0 %v590
    %602 = vmatpush.bf16.msra.mxu0 %v589
    %603 = vmatpush.bf16.msra.mxu0 %v588
    %604 = vmatpush.bf16.msra.mxu0 %v587
    %605 = vmatpush.bf16.msra.mxu0 %v586
    %606 = vmatpush.bf16.msra.mxu0 %v585
    %607 = vmatpush.bf16.msra.mxu0 %v584
    %608 = vmatmul.bf16.gmra.mxu0 %v535
    %v609 = vpop.f32.mrf.mxu0
    %v610 = vadd.f32 0.0, %v609
    %v611 = vpop.f32.mrf.mxu0
    %612 = vdwg.mxu0
    %v613 = vadd.f32 %v54, %v610
    %v614 = vld [vmem:[%s12] sm:$0x1]
    %v615 = vmul.f32 %v613, %v613
    %v616 = vsel %vm58, %v615, 0.0
    %617 = vadd.xlane.f32.xlu0 %v616
    %v618 = vpop.xlane.xlu0 %617
    %v619 = vmul.f32 %v618, %v68
    %v620 = vadd.f32 %v619, 1e-06
    %v621 = vrsqrt.pop %v620
    %v622 = vmul.f32 %v621, %v620
    %v623 = vmul.f32 %v622, %v621
    %v624 = vmul.f32 0.5, %v623
    %v625 = vsub.f32 1.5, %v624
    %v626 = vmul.f32 %v621, %v625
    %vm627 = vweird.f32 %v620
    %vm628 = vweird.f32 %v621
    %vm629 = vmor %vm627, %vm628
    %v630 = vsel %vm629, %v621, %v626
    %v631 = vmul.f32 %v613, %v630
    %v632 = vmul.f32 %v631, %v614
    %v633 = vpack.c.bf16 %v632, %v632
    %v634 = vld [vmem:[%s13] sm:$0xff]
    %v635 = vld [vmem:[%s13 + $0x8] sm:$0xff]
    %v636 = vld [vmem:[%s13 + $0x10] sm:$0xff]
    %v637 = vld [vmem:[%s13 + $0x18] sm:$0xff]
    %v638 = vld [vmem:[%s13 + $0x20] sm:$0xff]
    %v639 = vld [vmem:[%s13 + $0x28] sm:$0xff]
    %v640 = vld [vmem:[%s13 + $0x30] sm:$0xff]
    %v641 = vld [vmem:[%s13 + $0x38] sm:$0xff]
    %v642 = vld [vmem:[%s13 + $0x40] sm:$0xff]
    %v643 = vld [vmem:[%s13 + $0x48] sm:$0xff]
    %v644 = vld [vmem:[%s13 + $0x50] sm:$0xff]
    %v645 = vld [vmem:[%s13 + $0x58] sm:$0xff]
    %v646 = vld [vmem:[%s13 + $0x60] sm:$0xff]
    %v647 = vld [vmem:[%s13 + $0x68] sm:$0xff]
    %v648 = vld [vmem:[%s13 + $0x70] sm:$0xff]
    %v649 = vld [vmem:[%s13 + $0x78] sm:$0xff]
    %v650 = vld [vmem:[%s13 + $0x80] sm:$0xff]
    %v651 = vld [vmem:[%s13 + $0x88] sm:$0xff]
    %v652 = vld [vmem:[%s13 + $0x90] sm:$0xff]
    %v653 = vld [vmem:[%s13 + $0x98] sm:$0xff]
    %v654 = vld [vmem:[%s13 + $0xa0] sm:$0xff]
    %v655 = vld [vmem:[%s13 + $0xa8] sm:$0xff]
    %v656 = vld [vmem:[%s13 + $0xb0] sm:$0xff]
    %v657 = vld [vmem:[%s13 + $0xb8] sm:$0xff]
    %v658 = vld [vmem:[%s13 + $0xc0] sm:$0xff]
    %v659 = vld [vmem:[%s13 + $0xc8] sm:$0xff]
    %v660 = vld [vmem:[%s13 + $0xd0] sm:$0xff]
    %v661 = vld [vmem:[%s13 + $0xd8] sm:$0xff]
    %v662 = vld [vmem:[%s13 + $0xe0] sm:$0xff]
    %v663 = vld [vmem:[%s13 + $0xe8] sm:$0xff]
    %v664 = vld [vmem:[%s13 + $0xf0] sm:$0xff]
    %v665 = vld [vmem:[%s13 + $0xf8] sm:$0xff]
    %v698 = vunpack.c.l.b16 %v634
    %v699 = vunpack.c.h.b16 %v634
    %v700 = vunpack.c.l.b16 %v635
    %v701 = vunpack.c.h.b16 %v635
    %v702 = vunpack.c.l.b16 %v636
    %v703 = vunpack.c.h.b16 %v636
    %v704 = vunpack.c.l.b16 %v637
    %v705 = vunpack.c.h.b16 %v637
    %v706 = vunpack.c.l.b16 %v638
    %v707 = vunpack.c.h.b16 %v638
    %v708 = vunpack.c.l.b16 %v639
    %v709 = vunpack.c.h.b16 %v639
    %v710 = vunpack.c.l.b16 %v640
    %v711 = vunpack.c.h.b16 %v640
    %v712 = vunpack.c.l.b16 %v641
    %v713 = vunpack.c.h.b16 %v641
    %v714 = vunpack.c.l.b16 %v642
    %v715 = vunpack.c.h.b16 %v642
    %v716 = vunpack.c.l.b16 %v643
    %v717 = vunpack.c.h.b16 %v643
    %v718 = vunpack.c.l.b16 %v644
    %v719 = vunpack.c.h.b16 %v644
    %v720 = vunpack.c.l.b16 %v645
    %v721 = vunpack.c.h.b16 %v645
    %v722 = vunpack.c.l.b16 %v646
    %v723 = vunpack.c.h.b16 %v646
    %v724 = vunpack.c.l.b16 %v647
    %v725 = vunpack.c.h.b16 %v647
    %v726 = vunpack.c.l.b16 %v648
    %v727 = vunpack.c.h.b16 %v648
    %v728 = vunpack.c.l.b16 %v649
    %v729 = vunpack.c.h.b16 %v649
    %v730 = vunpack.c.l.b16 %v650
    %v731 = vunpack.c.h.b16 %v650
    %v732 = vunpack.c.l.b16 %v651
    %v733 = vunpack.c.h.b16 %v651
    %v734 = vunpack.c.l.b16 %v652
    %v735 = vunpack.c.h.b16 %v652
    %v736 = vunpack.c.l.b16 %v653
    %v737 = vunpack.c.h.b16 %v653
    %v738 = vunpack.c.l.b16 %v654
    %v739 = vunpack.c.h.b16 %v654
    %v740 = vunpack.c.l.b16 %v655
    %v741 = vunpack.c.h.b16 %v655
    %v742 = vunpack.c.l.b16 %v656
    %v743 = vunpack.c.h.b16 %v656
    %v744 = vunpack.c.l.b16 %v657
    %v745 = vunpack.c.h.b16 %v657
    %v746 = vunpack.c.l.b16 %v658
    %v747 = vunpack.c.h.b16 %v658
    %v748 = vunpack.c.l.b16 %v659
    %v749 = vunpack.c.h.b16 %v659
    %v750 = vunpack.c.l.b16 %v660
    %v751 = vunpack.c.h.b16 %v660
    %v752 = vunpack.c.l.b16 %v661
    %v753 = vunpack.c.h.b16 %v661
    %v754 = vunpack.c.l.b16 %v662
    %v755 = vunpack.c.h.b16 %v662
    %v756 = vunpack.c.l.b16 %v663
    %v757 = vunpack.c.h.b16 %v663
    %v758 = vunpack.c.l.b16 %v664
    %v759 = vunpack.c.h.b16 %v664
    %v760 = vunpack.c.l.b16 %v665
    %v761 = vunpack.c.h.b16 %v665
    %v762 = vpack.c.b16 %v702, %v698
    %v763 = vpack.c.b16 %v703, %v699
    %v764 = vpack.c.b16 %v704, %v700
    %v765 = vpack.c.b16 %v705, %v701
    %v766 = vpack.c.b16 %v710, %v706
    %v767 = vpack.c.b16 %v711, %v707
    %v768 = vpack.c.b16 %v712, %v708
    %v769 = vpack.c.b16 %v713, %v709
    %v770 = vpack.c.b16 %v718, %v714
    %v771 = vpack.c.b16 %v719, %v715
    %v772 = vpack.c.b16 %v720, %v716
    %v773 = vpack.c.b16 %v721, %v717
    %v774 = vpack.c.b16 %v726, %v722
    %v775 = vpack.c.b16 %v727, %v723
    %v776 = vpack.c.b16 %v728, %v724
    %v777 = vpack.c.b16 %v729, %v725
    %v778 = vpack.c.b16 %v734, %v730
    %v779 = vpack.c.b16 %v735, %v731
    %v780 = vpack.c.b16 %v736, %v732
    %v781 = vpack.c.b16 %v737, %v733
    %v782 = vpack.c.b16 %v742, %v738
    %v783 = vpack.c.b16 %v743, %v739
    %v784 = vpack.c.b16 %v744, %v740
    %v785 = vpack.c.b16 %v745, %v741
    %v786 = vpack.c.b16 %v750, %v746
    %v787 = vpack.c.b16 %v751, %v747
    %v788 = vpack.c.b16 %v752, %v748
    %v789 = vpack.c.b16 %v753, %v749
    %v790 = vpack.c.b16 %v758, %v754
    %v791 = vpack.c.b16 %v759, %v755
    %v792 = vpack.c.b16 %v760, %v756
    %v793 = vpack.c.b16 %v761, %v757
    %826 = vmatpush.bf16.msra.mxu0 %v790
    %827 = vmatpush.bf16.msra.mxu0 %v786
    %828 = vmatpush.bf16.msra.mxu0 %v782
    %829 = vmatpush.bf16.msra.mxu0 %v778
    %830 = vmatpush.bf16.msra.mxu0 %v774
    %831 = vmatpush.bf16.msra.mxu0 %v770
    %832 = vmatpush.bf16.msra.mxu0 %v766
    %833 = vmatpush.bf16.msra.mxu0 %v762
    %834 = vmatmul.bf16.gmra.mxu0 %v633
    %v835 = vpop.f32.mrf.mxu0
    %v836 = vadd.f32 0.0, %v835
    %v837 = vpop.f32.mrf.mxu0
    %838 = vdwg.mxu0
    %839 = vmatpush.bf16.msra.mxu0 %v791
    %840 = vmatpush.bf16.msra.mxu0 %v787
    %841 = vmatpush.bf16.msra.mxu0 %v783
    %842 = vmatpush.bf16.msra.mxu0 %v779
    %843 = vmatpush.bf16.msra.mxu0 %v775
    %844 = vmatpush.bf16.msra.mxu0 %v771
    %845 = vmatpush.bf16.msra.mxu0 %v767
    %846 = vmatpush.bf16.msra.mxu0 %v763
    %847 = vmatmul.bf16.gmra.mxu0 %v633
    %v848 = vpop.f32.mrf.mxu0
    %v849 = vadd.f32 0.0, %v848
    %v850 = vpop.f32.mrf.mxu0
    %851 = vdwg.mxu0
    %852 = vmatpush.bf16.msra.mxu0 %v792
    %853 = vmatpush.bf16.msra.mxu0 %v788
    %854 = vmatpush.bf16.msra.mxu0 %v784
    %855 = vmatpush.bf16.msra.mxu0 %v780
    %856 = vmatpush.bf16.msra.mxu0 %v776
    %857 = vmatpush.bf16.msra.mxu0 %v772
    %858 = vmatpush.bf16.msra.mxu0 %v768
    %859 = vmatpush.bf16.msra.mxu0 %v764
    %860 = vmatmul.bf16.gmra.mxu0 %v633
    %v861 = vpop.f32.mrf.mxu0
    %v862 = vadd.f32 0.0, %v861
    %v863 = vpop.f32.mrf.mxu0
    %864 = vdwg.mxu0
    %865 = vmatpush.bf16.msra.mxu0 %v793
    %866 = vmatpush.bf16.msra.mxu0 %v789
    %867 = vmatpush.bf16.msra.mxu0 %v785
    %868 = vmatpush.bf16.msra.mxu0 %v781
    %869 = vmatpush.bf16.msra.mxu0 %v777
    %870 = vmatpush.bf16.msra.mxu0 %v773
    %871 = vmatpush.bf16.msra.mxu0 %v769
    %872 = vmatpush.bf16.msra.mxu0 %v765
    %873 = vmatmul.bf16.gmra.mxu0 %v633
    %v874 = vpop.f32.mrf.mxu0
    %v875 = vadd.f32 0.0, %v874
    %v876 = vpop.f32.mrf.mxu0
    %877 = vdwg.mxu0
    %v878 = vxor.u32 %v836, 2147483648
    %v879 = vxor.u32 %v849, 2147483648
    %v880 = vmul.f32 %v878, 1.442695
    %v881 = vpow.pop %v880
    %v882 = vmul.f32 %v879, 1.442695
    %v883 = vpow.pop %v882
    %v884 = vadd.f32 %v881, 1.0
    %v885 = vadd.f32 %v883, 1.0
    %v886 = vrcp.pop %v884
    %v887 = vmul.f32 %v884, %v886
    %v888 = vsub.f32 1.0, %v887
    %v889 = vmul.f32 %v886, %v888
    %v890 = vadd.f32 %v886, %v889
    %vm891 = vweird.f32 %v884
    %vm892 = vweird.f32 %v886
    %vm893 = vmor %vm891, %vm892
    %v894 = vsel %vm893, %v886, %v890
    %v895 = vand.u32 2147483647, %v884
    %vm896 = vcmp.eq.f32.partialorder %v895, 8.507059e+37
    %v897 = vand.u32 %v884, 2147483648
    %v898 = vor.u32 1.1754944e-38, %v897
    %v899 = vsel %vm896, %v898, %v894
    %v900 = vmul.f32 1.0, %v899
    %v901 = vrcp.pop %v885
    %v902 = vmul.f32 %v885, %v901
    %v903 = vsub.f32 1.0, %v902
    %v904 = vmul.f32 %v901, %v903
    %v905 = vadd.f32 %v901, %v904
    %vm906 = vweird.f32 %v885
    %vm907 = vweird.f32 %v901
    %vm908 = vmor %vm906, %vm907
    %v909 = vsel %vm908, %v901, %v905
    %v910 = vand.u32 2147483647, %v885
    %vm911 = vcmp.eq.f32.partialorder %v910, 8.507059e+37
    %v912 = vand.u32 %v885, 2147483648
    %v913 = vor.u32 1.1754944e-38, %v912
    %v914 = vsel %vm911, %v913, %v909
    %v915 = vmul.f32 1.0, %v914
    %v916 = vmul.f32 %v836, %v900
    %v917 = vmul.f32 %v849, %v915
    %v918 = vmul.f32 %v916, %v862
    %v919 = vmul.f32 %v917, %v875
    %v920 = vpack.c.bf16 %v918, %v918
    %v921 = vpack.c.bf16 %v919, %v919
    %v922 = vld [vmem:[%s14] sm:$0xf]
    %v923 = vld [vmem:[%s14 + $0x4] sm:$0xf]
    %v924 = vld [vmem:[%s14 + $0x8] sm:$0xf]
    %v925 = vld [vmem:[%s14 + $0xc] sm:$0xf]
    %v926 = vld [vmem:[%s14 + $0x10] sm:$0xf]
    %v927 = vld [vmem:[%s14 + $0x14] sm:$0xf]
    %v928 = vld [vmem:[%s14 + $0x18] sm:$0xf]
    %v929 = vld [vmem:[%s14 + $0x1c] sm:$0xf]
    %v930 = vld [vmem:[%s14 + $0x20] sm:$0xf]
    %v931 = vld [vmem:[%s14 + $0x24] sm:$0xf]
    %v932 = vld [vmem:[%s14 + $0x28] sm:$0xf]
    %v933 = vld [vmem:[%s14 + $0x2c] sm:$0xf]
    %v934 = vld [vmem:[%s14 + $0x30] sm:$0xf]
    %v935 = vld [vmem:[%s14 + $0x34] sm:$0xf]
    %v936 = vld [vmem:[%s14 + $0x38] sm:$0xf]
    %v937 = vld [vmem:[%s14 + $0x3c] sm:$0xf]
    %v938 = vld [vmem:[%s14 + $0x40] sm:$0xf]
    %v939 = vld [vmem:[%s14 + $0x44] sm:$0xf]
    %v940 = vld [vmem:[%s14 + $0x48] sm:$0xf]
    %v941 = vld [vmem:[%s14 + $0x4c] sm:$0xf]
    %v942 = vld [vmem:[%s14 + $0x50] sm:$0xf]
    %v943 = vld [vmem:[%s14 + $0x54] sm:$0xf]
    %v944 = vld [vmem:[%s14 + $0x58] sm:$0xf]
    %v945 = vld [vmem:[%s14 + $0x5c] sm:$0xf]
    %v946 = vld [vmem:[%s14 + $0x60] sm:$0xf]
    %v947 = vld [vmem:[%s14 + $0x64] sm:$0xf]
    %v948 = vld [vmem:[%s14 + $0x68] sm:$0xf]
    %v949 = vld [vmem:[%s14 + $0x6c] sm:$0xf]
    %v950 = vld [vmem:[%s14 + $0x70] sm:$0xf]
    %v951 = vld [vmem:[%s14 + $0x74] sm:$0xf]
    %v952 = vld [vmem:[%s14 + $0x78] sm:$0xf]
    %v953 = vld [vmem:[%s14 + $0x7c] sm:$0xf]
    %v986 = vunpack.c.l.b16 %v922
    %v987 = vunpack.c.l.b16 %v923
    %v988 = vunpack.c.l.b16 %v924
    %v989 = vunpack.c.l.b16 %v925
    %v990 = vunpack.c.l.b16 %v926
    %v991 = vunpack.c.l.b16 %v927
    %v992 = vunpack.c.l.b16 %v928
    %v993 = vunpack.c.l.b16 %v929
    %v994 = vunpack.c.l.b16 %v930
    %v995 = vunpack.c.l.b16 %v931
    %v996 = vunpack.c.l.b16 %v932
    %v997 = vunpack.c.l.b16 %v933
    %v998 = vunpack.c.l.b16 %v934
    %v999 = vunpack.c.l.b16 %v935
    %v1000 = vunpack.c.l.b16 %v936
    %v1001 = vunpack.c.l.b16 %v937
    %v1002 = vunpack.c.l.b16 %v938
    %v1003 = vunpack.c.l.b16 %v939
    %v1004 = vunpack.c.l.b16 %v940
    %v1005 = vunpack.c.l.b16 %v941
    %v1006 = vunpack.c.l.b16 %v942
    %v1007 = vunpack.c.l.b16 %v943
    %v1008 = vunpack.c.l.b16 %v944
    %v1009 = vunpack.c.l.b16 %v945
    %v1010 = vunpack.c.l.b16 %v946
    %v1011 = vunpack.c.l.b16 %v947
    %v1012 = vunpack.c.l.b16 %v948
    %v1013 = vunpack.c.l.b16 %v949
    %v1014 = vunpack.c.l.b16 %v950
    %v1015 = vunpack.c.l.b16 %v951
    %v1016 = vunpack.c.l.b16 %v952
    %v1017 = vunpack.c.l.b16 %v953
    %v1018 = vpack.c.b16 %v987, %v986
    %v1019 = vpack.c.b16 %v989, %v988
    %v1020 = vpack.c.b16 %v991, %v990
    %v1021 = vpack.c.b16 %v993, %v992
    %v1022 = vpack.c.b16 %v995, %v994
    %v1023 = vpack.c.b16 %v997, %v996
    %v1024 = vpack.c.b16 %v999, %v998
    %v1025 = vpack.c.b16 %v1001, %v1000
    %v1026 = vpack.c.b16 %v1003, %v1002
    %v1027 = vpack.c.b16 %v1005, %v1004
    %v1028 = vpack.c.b16 %v1007, %v1006
    %v1029 = vpack.c.b16 %v1009, %v1008
    %v1030 = vpack.c.b16 %v1011, %v1010
    %v1031 = vpack.c.b16 %v1013, %v1012
    %v1032 = vpack.c.b16 %v1015, %v1014
    %v1033 = vpack.c.b16 %v1017, %v1016
    %1050 = vmatpush.bf16.msra.mxu0 %v1025
    %1051 = vmatpush.bf16.msra.mxu0 %v1024
    %1052 = vmatpush.bf16.msra.mxu0 %v1023
    %1053 = vmatpush.bf16.msra.mxu0 %v1022
    %1054 = vmatpush.bf16.msra.mxu0 %v1021
    %1055 = vmatpush.bf16.msra.mxu0 %v1020
    %1056 = vmatpush.bf16.msra.mxu0 %v1019
    %1057 = vmatpush.bf16.msra.mxu0 %v1018
    %1058 = vmatmul.bf16.gmra.mxu0 %v920
    %v1059 = vpop.f32.mrf.mxu0
    %v1060 = vadd.f32 0.0, %v1059
    %v1061 = vpop.f32.mrf.mxu0
    %1062 = vdwg.mxu0
    %1063 = vmatpush.bf16.msra.mxu0 %v1033
    %1064 = vmatpush.bf16.msra.mxu0 %v1032
    %1065 = vmatpush.bf16.msra.mxu0 %v1031
    %1066 = vmatpush.bf16.msra.mxu0 %v1030
    %1067 = vmatpush.bf16.msra.mxu0 %v1029
    %1068 = vmatpush.bf16.msra.mxu0 %v1028
    %1069 = vmatpush.bf16.msra.mxu0 %v1027
    %1070 = vmatpush.bf16.msra.mxu0 %v1026
    %1071 = vmatmul.bf16.gmra.mxu0 %v921
    %v1072 = vpop.f32.mrf.mxu0
    %v1073 = vadd.f32 %v1060, %v1072
    %v1074 = vpop.f32.mrf.mxu0
    %1075 = vdwg.mxu0
    %v1076 = vadd.f32 %v613, %v1073
    %1077 = vst [vmem:[#allocation2] sm:$0x1] %v1076
    // Predicated region
    $region62: #{block_cache_forward.1} parent=1 // pred_check
      _
    $region63: #{block_cache_forward.1} parent=1 // pred_check_branch
      %1079 = sbr.rel (0) target = $region65
    $region64: #{block_cache_forward.1} parent=1 // pred_region
      %1081 = vsyncadd [#allocation3], 0
      %s1083 = sshll.u32 [#allocation2], 4
      %s1084 = int_to_ptr.vmem [resolvable:$true] %s1083
      %s1085 = sshll.u32 %s15, 4
      %s1086 = int_to_ptr.hbm [resolvable:$true] %s1085
      %1088 = dma.vmem_to_hbm [thread:$0]  %s1084, 16, %s1086, [#allocation3]
    $region65: #{block_cache_forward.1} parent=1 // pred_fallthru
      _
    // Predicated region
    $region66: #{block_cache_forward.1} parent=1 // pred_check
      _
    $region67: #{block_cache_forward.1} parent=1 // pred_check_branch
      %1090 = sbr.rel (0) target = $region69
    $region68: #{block_cache_forward.1} parent=1 // pred_region
      _
    $region69: #{block_cache_forward.1} parent=1 // pred_fallthru
      _
    // Predicated region
    $region70: #{block_cache_forward.1} parent=1 // pred_check
      _
    $region71: #{block_cache_forward.1} parent=1 // pred_check_branch
      %1092 = sbr.rel (0) target = $region73
    $region72: #{block_cache_forward.1} parent=1 // pred_region
      _
    $region73: #{block_cache_forward.1} parent=1 // pred_fallthru
      _
    // Predicated region
    $region74: #{block_cache_forward.1} parent=1 // pred_check
      _
    $region75: #{block_cache_forward.1} parent=1 // pred_check_branch
      %1094 = sbr.rel (0) target = $region77
    $region76: #{block_cache_forward.1} parent=1 // pred_region
      %1096 = dma.done [#allocation3], 16
    $region77: #{block_cache_forward.1} parent=1 // pred_fallthru
      _
    // Predicated region
    $region78: #{block_cache_forward.1} parent=1 // pred_check
      _
    $region79: #{block_cache_forward.1} parent=1 // pred_check_branch
      %1098 = sbr.rel (0) target = $region81
    $region80: #{block_cache_forward.1} parent=1 // pred_region
      _
    $region81: #{block_cache_forward.1} parent=1 // pred_fallthru
      _
    // Predicated region
    $region82: #{block_cache_forward.1} parent=1 // pred_check
      _
    $region83: #{block_cache_forward.1} parent=1 // pred_check_branch
      %1100 = sbr.rel (0) target = $region85
    $region84: #{block_cache_forward.1} parent=1 // pred_region
      _
    $region85: #{block_cache_forward.1} parent=1 // pred_fallthru
      _
    %1101 = vsyncpa [#allocation3], 1

</llo_original>
